<compile_context>
chip_gen: v6e
topology: v6e:2x2x1
jax: 0.10.0
libtpu: 0.0.40
codegen_flags: <defaults>
</compile_context>

<pallas_src>
import jax
import jax.numpy as jnp
from jax.experimental import pallas as pl
from jax.experimental.pallas import tpu as pltpu

EPS = 1e-5


def conv_with_ibn(x, w, in_gamma, in_beta, bn_gamma, bn_beta, bn_mean, bn_var,
                  eps=EPS):
    """Eval-mode forward of Conv_With_IBN.

    x: (N, C1, H, W) f32
    w: (C2, C1, K, K) f32 conv weight (K odd, stride 1, groups 1, no bias)
    in_gamma / in_beta: (half,) InstanceNorm2d affine params
    bn_gamma / bn_beta / bn_mean / bn_var: (C2 - half,) BatchNorm2d params/stats
    """
    N, C1, H, W = x.shape
    C2, C1w, K, K2 = w.shape
    assert C1w == C1 and K == K2 and K % 2 == 1, "supports odd k, s=1, g=1"
    half = int(C2 * 0.5)
    HW = H * W
    pad = K // 2
    f32 = jnp.float32

    # Per-channel parameter table (C2, 4): [IN gamma, IN beta, BN scale, BN shift]
    bn_scale = bn_gamma.astype(f32) * jax.lax.rsqrt(bn_var.astype(f32) + eps)
    bn_shift = bn_beta.astype(f32) - bn_mean.astype(f32) * bn_scale
    zeros_bn = jnp.zeros((C2 - half,), f32)
    zeros_in = jnp.zeros((half,), f32)
    params = jnp.stack([
        jnp.concatenate([in_gamma.astype(f32), zeros_bn]),
        jnp.concatenate([in_beta.astype(f32), zeros_bn]),
        jnp.concatenate([zeros_in, bn_scale]),
        jnp.concatenate([zeros_in, bn_shift]),
    ], axis=1)                                                # (C2, 4)

    # Conv weights regrouped per tap: tap t = i*K + j -> (C2, C1) matrix.
    w_taps = jnp.transpose(w.astype(f32), (2, 3, 0, 1)).reshape(K * K, C2, C1)

    # Precomputed flattened spatial coordinates (avoids in-kernel int div/mod).
    hw_idx = jnp.arange(HW, dtype=jnp.int32)
    rc = jnp.stack([hw_idx // W, hw_idx % W], axis=0)         # (2, HW) int32

    x_flat = x.reshape(N, C1, HW)

    def kernel(x_ref, w_ref, rc_ref, p_ref, o_ref):
        xv = x_ref[0]
        if xv.dtype != jnp.float32:
            xv = xv.astype(jnp.float32)

        row = rc_ref[0:1, :]                                  # (1, HW)
        col = rc_ref[1:2, :]                                  # (1, HW)

        # --- k x k same-padding conv: K*K lane-rolled MXU matmuls ---
        acc = jnp.zeros((C2, HW), jnp.float32)
        for i in range(K):
            for j in range(K):
                dy, dx = i - pad, j - pad
                shift = (-(dy * W + dx)) % HW                 # static Python int
                xs = pltpu.roll(xv, shift, axis=1) if shift else xv
                if dy or dx:
                    valid = ((row >= -dy) & (row < H - dy) &
                             (col >= -dx) & (col < W - dx))
                    xs = jnp.where(valid, xs, 0.0)
                acc = acc + jnp.dot(w_ref[i * K + j], xs,
                                    preferred_element_type=jnp.float32)

        # --- IBN: instance norm on channels [0, half), eval BN on the rest ---
        mu = jnp.mean(acc, axis=1, keepdims=True)             # (C2, 1)
        var = jnp.mean((acc - mu) ** 2, axis=1, keepdims=True)
        inv_std = jax.lax.rsqrt(var + eps)

        g_in, b_in = p_ref[:, 0:1], p_ref[:, 1:2]
        bn_s, bn_t = p_ref[:, 2:3], p_ref[:, 3:4]
        in_scale = g_in * inv_std
        in_shift = b_in - mu * in_scale

        c_idx = jax.lax.broadcasted_iota(jnp.int32, (C2, 1), 0)
        is_in = c_idx < half
        scale = jnp.where(is_in, in_scale, bn_s)
        shift_v = jnp.where(is_in, in_shift, bn_t)

        # --- SiLU and single lane-dense store ---
        z = acc * scale + shift_v
        o_ref[0] = (z * jax.nn.sigmoid(z)).astype(o_ref.dtype)

    out_flat = pl.pallas_call(
        kernel,
        out_shape=jax.ShapeDtypeStruct((N, C2, HW), x.dtype),
        grid=(N,),
        in_specs=[
            pl.BlockSpec((1, C1, HW), lambda n: (n, 0, 0)),
            pl.BlockSpec((K * K, C2, C1), lambda n: (0, 0, 0)),
            pl.BlockSpec((2, HW), lambda n: (0, 0)),
            pl.BlockSpec((C2, 4), lambda n: (0, 0)),
        ],
        out_specs=pl.BlockSpec((1, C2, HW), lambda n: (n, 0, 0)),
        compiler_params=pltpu.CompilerParams(
            dimension_semantics=("parallel",),
            vmem_limit_bytes=32 * 1024 * 1024),
    )(x_flat, w_taps, rc, params)

    return out_flat.reshape(N, C2, H, W)


def conv_with_ibn_ref(x, w, in_gamma, in_beta, bn_gamma, bn_beta, bn_mean,
                      bn_var, eps=EPS):
    """Pure-JAX reference mirroring the PyTorch eval-mode forward."""
    C2, _, K, _ = w.shape
    half = int(C2 * 0.5)
    p = K // 2
    y = jax.lax.conv_general_dilated(
        x, w, window_strides=(1, 1), padding=((p, p), (p, p)),
        dimension_numbers=('NCHW', 'OIHW', 'NCHW'))
    y_in, y_bn = y[:, :half], y[:, half:]
    mu = jnp.mean(y_in, axis=(2, 3), keepdims=True)
    var = jnp.mean((y_in - mu) ** 2, axis=(2, 3), keepdims=True)
    z_in = (y_in - mu) * jax.lax.rsqrt(var + eps)
    z_in = z_in * in_gamma.reshape(1, -1, 1, 1) + in_beta.reshape(1, -1, 1, 1)
    z_bn = (y_bn - bn_mean.reshape(1, -1, 1, 1)) * jax.lax.rsqrt(
        bn_var.reshape(1, -1, 1, 1) + eps)
    z_bn = z_bn * bn_gamma.reshape(1, -1, 1, 1) + bn_beta.reshape(1, -1, 1, 1)
    z = jnp.concatenate([z_in, z_bn], axis=1)
    return z * jax.nn.sigmoid(z)


if __name__ == "__main__":
    N, C1, C2, H, W, K = 2, 4, 8, 16, 16, 3
    half = int(C2 * 0.5)
    key = jax.random.PRNGKey(0)
    ks = jax.random.split(key, 9)

    x = jax.random.normal(ks[0], (N, C1, H, W), jnp.float32)
    w3 = jax.random.normal(ks[1], (C2, C1, K, K), jnp.float32) * 0.2
    w1 = jax.random.normal(ks[8], (C2, C1, 1, 1), jnp.float32) * 0.5
    in_gamma = 1.0 + 0.1 * jax.random.normal(ks[2], (half,), jnp.float32)
    in_beta = 0.1 * jax.random.normal(ks[3], (half,), jnp.float32)
    bn_gamma = 1.0 + 0.1 * jax.random.normal(ks[4], (C2 - half,), jnp.float32)
    bn_beta = 0.1 * jax.random.normal(ks[5], (C2 - half,), jnp.float32)
    bn_mean = 0.1 * jax.random.normal(ks[6], (C2 - half,), jnp.float32)
    bn_var = jax.random.uniform(ks[7], (C2 - half,), jnp.float32, 0.5, 1.5)

    # Check both the typical YOLO 3x3 conv and the module default k=1.
    for wk in (w3, w1):
        out = conv_with_ibn(x, wk, in_gamma, in_beta, bn_gamma, bn_beta,
                            bn_mean, bn_var)
        out = jax.block_until_ready(out)
        ref = conv_with_ibn_ref(x, wk, in_gamma, in_beta, bn_gamma, bn_beta,
                                bn_mean, bn_var)
        assert out.shape == (N, C2, H, W) and out.dtype == jnp.float32
        err = float(jnp.max(jnp.abs(out - ref)))
        assert jnp.allclose(out, ref, atol=1e-4, rtol=1e-4), \
            f"k={wk.shape[-1]}: max abs diff {err}"

    print("KERNEL_OK")
</pallas_src>

<mosaic_0001>
module attributes {stable_mosaic.version = 11 : i64} {
  func.func @kernel(%arg0: i32, %arg1: memref<1x4x256xf32, #tpu.memory_space<vmem>>, %arg2: memref<9x8x4xf32, #tpu.memory_space<vmem>>, %arg3: memref<2x256xi32, #tpu.memory_space<vmem>>, %arg4: memref<8x4xf32, #tpu.memory_space<vmem>>, %arg5: memref<1x8x256xf32, #tpu.memory_space<vmem>>) attributes {dimension_semantics = [#tpu.dimension_semantics<parallel>], iteration_bounds = array<i64: 2>, scalar_prefetch = 0 : i64, scratch_operands = 0 : i64, tpu.core_type = #tpu.core_type<tc>, window_params = [{transform_indices = @transform_0, window_bounds = array<i64: 1, 4, 256>}, {pipeline_mode = #tpu.pipeline_mode<synchronous>, transform_indices = @transform_1, window_bounds = array<i64: 9, 8, 4>}, {pipeline_mode = #tpu.pipeline_mode<synchronous>, transform_indices = @transform_2, window_bounds = array<i64: 2, 256>}, {pipeline_mode = #tpu.pipeline_mode<synchronous>, transform_indices = @transform_3, window_bounds = array<i64: 8, 4>}, {transform_indices = @transform_4, window_bounds = array<i64: 1, 8, 256>}]} {
    %c0 = arith.constant 0 : index
    %c0_0 = arith.constant 0 : index
    %c0_1 = arith.constant 0 : index
    %0 = vector.load %arg1[%c0, %c0_0, %c0_1] : memref<1x4x256xf32, #tpu.memory_space<vmem>>, vector<1x4x256xf32>
    %1 = vector.shape_cast %0 : vector<1x4x256xf32> to vector<4x256xf32>
    %c0_2 = arith.constant 0 : index
    %c0_3 = arith.constant 0 : index
    %2 = vector.load %arg3[%c0_2, %c0_3] : memref<2x256xi32, #tpu.memory_space<vmem>>, vector<1x256xi32>
    %c1 = arith.constant 1 : index
    %c0_4 = arith.constant 0 : index
    %3 = vector.load %arg3[%c1, %c0_4] : memref<2x256xi32, #tpu.memory_space<vmem>>, vector<1x256xi32>
    %cst = arith.constant 0.000000e+00 : f32
    %4 = vector.broadcast %cst : f32 to vector<8x256xf32>
    %c17_i32 = arith.constant 17 : i32
    %5 = tpu.dynamic_rotate %1 by %c17_i32 dim 1 : vector<4x256xf32>, i32 -> vector<4x256xf32>
    %c1_i32 = arith.constant 1 : i32
    %6 = vector.broadcast %c1_i32 : i32 to vector<1x256xi32>
    %7 = arith.cmpi sge, %2, %6 : vector<1x256xi32>
    %c17_i32_5 = arith.constant 17 : i32
    %8 = vector.broadcast %c17_i32_5 : i32 to vector<1x256xi32>
    %9 = arith.cmpi slt, %2, %8 : vector<1x256xi32>
    %10 = arith.andi %7, %9 : vector<1x256xi1>
    %c1_i32_6 = arith.constant 1 : i32
    %11 = vector.broadcast %c1_i32_6 : i32 to vector<1x256xi32>
    %12 = arith.cmpi sge, %3, %11 : vector<1x256xi32>
    %13 = arith.andi %10, %12 : vector<1x256xi1>
    %c17_i32_7 = arith.constant 17 : i32
    %14 = vector.broadcast %c17_i32_7 : i32 to vector<1x256xi32>
    %15 = arith.cmpi slt, %3, %14 : vector<1x256xi32>
    %16 = arith.andi %13, %15 : vector<1x256xi1>
    %cst_8 = arith.constant 0.000000e+00 : f32
    %17 = vector.shape_cast %16 : vector<1x256xi1> to vector<1x256xi1>
    %18 = vector.broadcast %17 : vector<1x256xi1> to vector<4x256xi1>
    %19 = vector.broadcast %cst_8 : f32 to vector<4x256xf32>
    %20 = arith.select %18, %5, %19 : vector<4x256xi1>, vector<4x256xf32>
    %c0_9 = arith.constant 0 : index
    %c0_10 = arith.constant 0 : index
    %c0_11 = arith.constant 0 : index
    %21 = vector.load %arg2[%c0_9, %c0_10, %c0_11] : memref<9x8x4xf32, #tpu.memory_space<vmem>>, vector<1x8x4xf32>
    %22 = vector.shape_cast %21 : vector<1x8x4xf32> to vector<8x4xf32>
    %cst_12 = arith.constant dense<0.000000e+00> : vector<8x256xf32>
    %23 = tpu.matmul %22, %20, %cst_12 {dimension_numbers = #tpu.dot_dimension_numbers<[1], [0], [0], [1], [0, 0, 1, 1], [], []>} : vector<8x4xf32>, vector<4x256xf32>, vector<8x256xf32> -> vector<8x256xf32>
    %24 = arith.addf %4, %23 : vector<8x256xf32>
    %c16_i32 = arith.constant 16 : i32
    %25 = tpu.dynamic_rotate %1 by %c16_i32 dim 1 : vector<4x256xf32>, i32 -> vector<4x256xf32>
    %c1_i32_13 = arith.constant 1 : i32
    %26 = vector.broadcast %c1_i32_13 : i32 to vector<1x256xi32>
    %27 = arith.cmpi sge, %2, %26 : vector<1x256xi32>
    %c17_i32_14 = arith.constant 17 : i32
    %28 = vector.broadcast %c17_i32_14 : i32 to vector<1x256xi32>
    %29 = arith.cmpi slt, %2, %28 : vector<1x256xi32>
    %30 = arith.andi %27, %29 : vector<1x256xi1>
    %c0_i32 = arith.constant 0 : i32
    %31 = vector.broadcast %c0_i32 : i32 to vector<1x256xi32>
    %32 = arith.cmpi sge, %3, %31 : vector<1x256xi32>
    %33 = arith.andi %30, %32 : vector<1x256xi1>
    %c16_i32_15 = arith.constant 16 : i32
    %34 = vector.broadcast %c16_i32_15 : i32 to vector<1x256xi32>
    %35 = arith.cmpi slt, %3, %34 : vector<1x256xi32>
    %36 = arith.andi %33, %35 : vector<1x256xi1>
    %cst_16 = arith.constant 0.000000e+00 : f32
    %37 = vector.shape_cast %36 : vector<1x256xi1> to vector<1x256xi1>
    %38 = vector.broadcast %37 : vector<1x256xi1> to vector<4x256xi1>
    %39 = vector.broadcast %cst_16 : f32 to vector<4x256xf32>
    %40 = arith.select %38, %25, %39 : vector<4x256xi1>, vector<4x256xf32>
    %c1_17 = arith.constant 1 : index
    %c0_18 = arith.constant 0 : index
    %c0_19 = arith.constant 0 : index
    %41 = vector.load %arg2[%c1_17, %c0_18, %c0_19] : memref<9x8x4xf32, #tpu.memory_space<vmem>>, vector<1x8x4xf32>
    %42 = vector.shape_cast %41 : vector<1x8x4xf32> to vector<8x4xf32>
    %cst_20 = arith.constant dense<0.000000e+00> : vector<8x256xf32>
    %43 = tpu.matmul %42, %40, %cst_20 {dimension_numbers = #tpu.dot_dimension_numbers<[1], [0], [0], [1], [0, 0, 1, 1], [], []>} : vector<8x4xf32>, vector<4x256xf32>, vector<8x256xf32> -> vector<8x256xf32>
    %44 = arith.addf %24, %43 : vector<8x256xf32>
    %c15_i32 = arith.constant 15 : i32
    %45 = tpu.dynamic_rotate %1 by %c15_i32 dim 1 : vector<4x256xf32>, i32 -> vector<4x256xf32>
    %c1_i32_21 = arith.constant 1 : i32
    %46 = vector.broadcast %c1_i32_21 : i32 to vector<1x256xi32>
    %47 = arith.cmpi sge, %2, %46 : vector<1x256xi32>
    %c17_i32_22 = arith.constant 17 : i32
    %48 = vector.broadcast %c17_i32_22 : i32 to vector<1x256xi32>
    %49 = arith.cmpi slt, %2, %48 : vector<1x256xi32>
    %50 = arith.andi %47, %49 : vector<1x256xi1>
    %c-1_i32 = arith.constant -1 : i32
    %51 = vector.broadcast %c-1_i32 : i32 to vector<1x256xi32>
    %52 = arith.cmpi sge, %3, %51 : vector<1x256xi32>
    %53 = arith.andi %50, %52 : vector<1x256xi1>
    %c15_i32_23 = arith.constant 15 : i32
    %54 = vector.broadcast %c15_i32_23 : i32 to vector<1x256xi32>
    %55 = arith.cmpi slt, %3, %54 : vector<1x256xi32>
    %56 = arith.andi %53, %55 : vector<1x256xi1>
    %cst_24 = arith.constant 0.000000e+00 : f32
    %57 = vector.shape_cast %56 : vector<1x256xi1> to vector<1x256xi1>
    %58 = vector.broadcast %57 : vector<1x256xi1> to vector<4x256xi1>
    %59 = vector.broadcast %cst_24 : f32 to vector<4x256xf32>
    %60 = arith.select %58, %45, %59 : vector<4x256xi1>, vector<4x256xf32>
    %c2 = arith.constant 2 : index
    %c0_25 = arith.constant 0 : index
    %c0_26 = arith.constant 0 : index
    %61 = vector.load %arg2[%c2, %c0_25, %c0_26] : memref<9x8x4xf32, #tpu.memory_space<vmem>>, vector<1x8x4xf32>
    %62 = vector.shape_cast %61 : vector<1x8x4xf32> to vector<8x4xf32>
    %cst_27 = arith.constant dense<0.000000e+00> : vector<8x256xf32>
    %63 = tpu.matmul %62, %60, %cst_27 {dimension_numbers = #tpu.dot_dimension_numbers<[1], [0], [0], [1], [0, 0, 1, 1], [], []>} : vector<8x4xf32>, vector<4x256xf32>, vector<8x256xf32> -> vector<8x256xf32>
    %64 = arith.addf %44, %63 : vector<8x256xf32>
    %c1_i32_28 = arith.constant 1 : i32
    %65 = tpu.dynamic_rotate %1 by %c1_i32_28 dim 1 : vector<4x256xf32>, i32 -> vector<4x256xf32>
    %c0_i32_29 = arith.constant 0 : i32
    %66 = vector.broadcast %c0_i32_29 : i32 to vector<1x256xi32>
    %67 = arith.cmpi sge, %2, %66 : vector<1x256xi32>
    %c16_i32_30 = arith.constant 16 : i32
    %68 = vector.broadcast %c16_i32_30 : i32 to vector<1x256xi32>
    %69 = arith.cmpi slt, %2, %68 : vector<1x256xi32>
    %70 = arith.andi %67, %69 : vector<1x256xi1>
    %c1_i32_31 = arith.constant 1 : i32
    %71 = vector.broadcast %c1_i32_31 : i32 to vector<1x256xi32>
    %72 = arith.cmpi sge, %3, %71 : vector<1x256xi32>
    %73 = arith.andi %70, %72 : vector<1x256xi1>
    %c17_i32_32 = arith.constant 17 : i32
    %74 = vector.broadcast %c17_i32_32 : i32 to vector<1x256xi32>
    %75 = arith.cmpi slt, %3, %74 : vector<1x256xi32>
    %76 = arith.andi %73, %75 : vector<1x256xi1>
    %cst_33 = arith.constant 0.000000e+00 : f32
    %77 = vector.shape_cast %76 : vector<1x256xi1> to vector<1x256xi1>
    %78 = vector.broadcast %77 : vector<1x256xi1> to vector<4x256xi1>
    %79 = vector.broadcast %cst_33 : f32 to vector<4x256xf32>
    %80 = arith.select %78, %65, %79 : vector<4x256xi1>, vector<4x256xf32>
    %c3 = arith.constant 3 : index
    %c0_34 = arith.constant 0 : index
    %c0_35 = arith.constant 0 : index
    %81 = vector.load %arg2[%c3, %c0_34, %c0_35] : memref<9x8x4xf32, #tpu.memory_space<vmem>>, vector<1x8x4xf32>
    %82 = vector.shape_cast %81 : vector<1x8x4xf32> to vector<8x4xf32>
    %cst_36 = arith.constant dense<0.000000e+00> : vector<8x256xf32>
    %83 = tpu.matmul %82, %80, %cst_36 {dimension_numbers = #tpu.dot_dimension_numbers<[1], [0], [0], [1], [0, 0, 1, 1], [], []>} : vector<8x4xf32>, vector<4x256xf32>, vector<8x256xf32> -> vector<8x256xf32>
    %84 = arith.addf %64, %83 : vector<8x256xf32>
    %c4 = arith.constant 4 : index
    %c0_37 = arith.constant 0 : index
    %c0_38 = arith.constant 0 : index
    %85 = vector.load %arg2[%c4, %c0_37, %c0_38] : memref<9x8x4xf32, #tpu.memory_space<vmem>>, vector<1x8x4xf32>
    %86 = vector.shape_cast %85 : vector<1x8x4xf32> to vector<8x4xf32>
    %cst_39 = arith.constant dense<0.000000e+00> : vector<8x256xf32>
    %87 = tpu.matmul %86, %1, %cst_39 {dimension_numbers = #tpu.dot_dimension_numbers<[1], [0], [0], [1], [0, 0, 1, 1], [], []>} : vector<8x4xf32>, vector<4x256xf32>, vector<8x256xf32> -> vector<8x256xf32>
    %88 = arith.addf %84, %87 : vector<8x256xf32>
    %c255_i32 = arith.constant 255 : i32
    %89 = tpu.dynamic_rotate %1 by %c255_i32 dim 1 : vector<4x256xf32>, i32 -> vector<4x256xf32>
    %c0_i32_40 = arith.constant 0 : i32
    %90 = vector.broadcast %c0_i32_40 : i32 to vector<1x256xi32>
    %91 = arith.cmpi sge, %2, %90 : vector<1x256xi32>
    %c16_i32_41 = arith.constant 16 : i32
    %92 = vector.broadcast %c16_i32_41 : i32 to vector<1x256xi32>
    %93 = arith.cmpi slt, %2, %92 : vector<1x256xi32>
    %94 = arith.andi %91, %93 : vector<1x256xi1>
    %c-1_i32_42 = arith.constant -1 : i32
    %95 = vector.broadcast %c-1_i32_42 : i32 to vector<1x256xi32>
    %96 = arith.cmpi sge, %3, %95 : vector<1x256xi32>
    %97 = arith.andi %94, %96 : vector<1x256xi1>
    %c15_i32_43 = arith.constant 15 : i32
    %98 = vector.broadcast %c15_i32_43 : i32 to vector<1x256xi32>
    %99 = arith.cmpi slt, %3, %98 : vector<1x256xi32>
    %100 = arith.andi %97, %99 : vector<1x256xi1>
    %cst_44 = arith.constant 0.000000e+00 : f32
    %101 = vector.shape_cast %100 : vector<1x256xi1> to vector<1x256xi1>
    %102 = vector.broadcast %101 : vector<1x256xi1> to vector<4x256xi1>
    %103 = vector.broadcast %cst_44 : f32 to vector<4x256xf32>
    %104 = arith.select %102, %89, %103 : vector<4x256xi1>, vector<4x256xf32>
    %c5 = arith.constant 5 : index
    %c0_45 = arith.constant 0 : index
    %c0_46 = arith.constant 0 : index
    %105 = vector.load %arg2[%c5, %c0_45, %c0_46] : memref<9x8x4xf32, #tpu.memory_space<vmem>>, vector<1x8x4xf32>
    %106 = vector.shape_cast %105 : vector<1x8x4xf32> to vector<8x4xf32>
    %cst_47 = arith.constant dense<0.000000e+00> : vector<8x256xf32>
    %107 = tpu.matmul %106, %104, %cst_47 {dimension_numbers = #tpu.dot_dimension_numbers<[1], [0], [0], [1], [0, 0, 1, 1], [], []>} : vector<8x4xf32>, vector<4x256xf32>, vector<8x256xf32> -> vector<8x256xf32>
    %108 = arith.addf %88, %107 : vector<8x256xf32>
    %c241_i32 = arith.constant 241 : i32
    %109 = tpu.dynamic_rotate %1 by %c241_i32 dim 1 : vector<4x256xf32>, i32 -> vector<4x256xf32>
    %c-1_i32_48 = arith.constant -1 : i32
    %110 = vector.broadcast %c-1_i32_48 : i32 to vector<1x256xi32>
    %111 = arith.cmpi sge, %2, %110 : vector<1x256xi32>
    %c15_i32_49 = arith.constant 15 : i32
    %112 = vector.broadcast %c15_i32_49 : i32 to vector<1x256xi32>
    %113 = arith.cmpi slt, %2, %112 : vector<1x256xi32>
    %114 = arith.andi %111, %113 : vector<1x256xi1>
    %c1_i32_50 = arith.constant 1 : i32
    %115 = vector.broadcast %c1_i32_50 : i32 to vector<1x256xi32>
    %116 = arith.cmpi sge, %3, %115 : vector<1x256xi32>
    %117 = arith.andi %114, %116 : vector<1x256xi1>
    %c17_i32_51 = arith.constant 17 : i32
    %118 = vector.broadcast %c17_i32_51 : i32 to vector<1x256xi32>
    %119 = arith.cmpi slt, %3, %118 : vector<1x256xi32>
    %120 = arith.andi %117, %119 : vector<1x256xi1>
    %cst_52 = arith.constant 0.000000e+00 : f32
    %121 = vector.shape_cast %120 : vector<1x256xi1> to vector<1x256xi1>
    %122 = vector.broadcast %121 : vector<1x256xi1> to vector<4x256xi1>
    %123 = vector.broadcast %cst_52 : f32 to vector<4x256xf32>
    %124 = arith.select %122, %109, %123 : vector<4x256xi1>, vector<4x256xf32>
    %c6 = arith.constant 6 : index
    %c0_53 = arith.constant 0 : index
    %c0_54 = arith.constant 0 : index
    %125 = vector.load %arg2[%c6, %c0_53, %c0_54] : memref<9x8x4xf32, #tpu.memory_space<vmem>>, vector<1x8x4xf32>
    %126 = vector.shape_cast %125 : vector<1x8x4xf32> to vector<8x4xf32>
    %cst_55 = arith.constant dense<0.000000e+00> : vector<8x256xf32>
    %127 = tpu.matmul %126, %124, %cst_55 {dimension_numbers = #tpu.dot_dimension_numbers<[1], [0], [0], [1], [0, 0, 1, 1], [], []>} : vector<8x4xf32>, vector<4x256xf32>, vector<8x256xf32> -> vector<8x256xf32>
    %128 = arith.addf %108, %127 : vector<8x256xf32>
    %c240_i32 = arith.constant 240 : i32
    %129 = tpu.dynamic_rotate %1 by %c240_i32 dim 1 : vector<4x256xf32>, i32 -> vector<4x256xf32>
    %c-1_i32_56 = arith.constant -1 : i32
    %130 = vector.broadcast %c-1_i32_56 : i32 to vector<1x256xi32>
    %131 = arith.cmpi sge, %2, %130 : vector<1x256xi32>
    %c15_i32_57 = arith.constant 15 : i32
    %132 = vector.broadcast %c15_i32_57 : i32 to vector<1x256xi32>
    %133 = arith.cmpi slt, %2, %132 : vector<1x256xi32>
    %134 = arith.andi %131, %133 : vector<1x256xi1>
    %c0_i32_58 = arith.constant 0 : i32
    %135 = vector.broadcast %c0_i32_58 : i32 to vector<1x256xi32>
    %136 = arith.cmpi sge, %3, %135 : vector<1x256xi32>
    %137 = arith.andi %134, %136 : vector<1x256xi1>
    %c16_i32_59 = arith.constant 16 : i32
    %138 = vector.broadcast %c16_i32_59 : i32 to vector<1x256xi32>
    %139 = arith.cmpi slt, %3, %138 : vector<1x256xi32>
    %140 = arith.andi %137, %139 : vector<1x256xi1>
    %cst_60 = arith.constant 0.000000e+00 : f32
    %141 = vector.shape_cast %140 : vector<1x256xi1> to vector<1x256xi1>
    %142 = vector.broadcast %141 : vector<1x256xi1> to vector<4x256xi1>
    %143 = vector.broadcast %cst_60 : f32 to vector<4x256xf32>
    %144 = arith.select %142, %129, %143 : vector<4x256xi1>, vector<4x256xf32>
    %c7 = arith.constant 7 : index
    %c0_61 = arith.constant 0 : index
    %c0_62 = arith.constant 0 : index
    %145 = vector.load %arg2[%c7, %c0_61, %c0_62] : memref<9x8x4xf32, #tpu.memory_space<vmem>>, vector<1x8x4xf32>
    %146 = vector.shape_cast %145 : vector<1x8x4xf32> to vector<8x4xf32>
    %cst_63 = arith.constant dense<0.000000e+00> : vector<8x256xf32>
    %147 = tpu.matmul %146, %144, %cst_63 {dimension_numbers = #tpu.dot_dimension_numbers<[1], [0], [0], [1], [0, 0, 1, 1], [], []>} : vector<8x4xf32>, vector<4x256xf32>, vector<8x256xf32> -> vector<8x256xf32>
    %148 = arith.addf %128, %147 : vector<8x256xf32>
    %c239_i32 = arith.constant 239 : i32
    %149 = tpu.dynamic_rotate %1 by %c239_i32 dim 1 : vector<4x256xf32>, i32 -> vector<4x256xf32>
    %c-1_i32_64 = arith.constant -1 : i32
    %150 = vector.broadcast %c-1_i32_64 : i32 to vector<1x256xi32>
    %151 = arith.cmpi sge, %2, %150 : vector<1x256xi32>
    %c15_i32_65 = arith.constant 15 : i32
    %152 = vector.broadcast %c15_i32_65 : i32 to vector<1x256xi32>
    %153 = arith.cmpi slt, %2, %152 : vector<1x256xi32>
    %154 = arith.andi %151, %153 : vector<1x256xi1>
    %c-1_i32_66 = arith.constant -1 : i32
    %155 = vector.broadcast %c-1_i32_66 : i32 to vector<1x256xi32>
    %156 = arith.cmpi sge, %3, %155 : vector<1x256xi32>
    %157 = arith.andi %154, %156 : vector<1x256xi1>
    %c15_i32_67 = arith.constant 15 : i32
    %158 = vector.broadcast %c15_i32_67 : i32 to vector<1x256xi32>
    %159 = arith.cmpi slt, %3, %158 : vector<1x256xi32>
    %160 = arith.andi %157, %159 : vector<1x256xi1>
    %cst_68 = arith.constant 0.000000e+00 : f32
    %161 = vector.shape_cast %160 : vector<1x256xi1> to vector<1x256xi1>
    %162 = vector.broadcast %161 : vector<1x256xi1> to vector<4x256xi1>
    %163 = vector.broadcast %cst_68 : f32 to vector<4x256xf32>
    %164 = arith.select %162, %149, %163 : vector<4x256xi1>, vector<4x256xf32>
    %c8 = arith.constant 8 : index
    %c0_69 = arith.constant 0 : index
    %c0_70 = arith.constant 0 : index
    %165 = vector.load %arg2[%c8, %c0_69, %c0_70] : memref<9x8x4xf32, #tpu.memory_space<vmem>>, vector<1x8x4xf32>
    %166 = vector.shape_cast %165 : vector<1x8x4xf32> to vector<8x4xf32>
    %cst_71 = arith.constant dense<0.000000e+00> : vector<8x256xf32>
    %167 = tpu.matmul %166, %164, %cst_71 {dimension_numbers = #tpu.dot_dimension_numbers<[1], [0], [0], [1], [0, 0, 1, 1], [], []>} : vector<8x4xf32>, vector<4x256xf32>, vector<8x256xf32> -> vector<8x256xf32>
    %168 = arith.addf %148, %167 : vector<8x256xf32>
    %cst_72 = arith.constant dense<0.000000e+00> : vector<8xf32>
    %169 = vector.multi_reduction <add>, %168, %cst_72 [1] : vector<8x256xf32> to vector<8xf32>
    %170 = vector.shape_cast %169 : vector<8xf32> to vector<8x1xf32>
    %cst_73 = arith.constant 2.560000e+02 : f32
    %171 = vector.broadcast %cst_73 : f32 to vector<8x1xf32>
    %172 = arith.divf %170, %171 : vector<8x1xf32>
    %173 = vector.broadcast %172 : vector<8x1xf32> to vector<8x256xf32>
    %174 = arith.subf %168, %173 : vector<8x256xf32>
    %175 = arith.mulf %174, %174 : vector<8x256xf32>
    %cst_74 = arith.constant dense<0.000000e+00> : vector<8xf32>
    %176 = vector.multi_reduction <add>, %175, %cst_74 [1] : vector<8x256xf32> to vector<8xf32>
    %177 = vector.shape_cast %176 : vector<8xf32> to vector<8x1xf32>
    %cst_75 = arith.constant 2.560000e+02 : f32
    %178 = vector.broadcast %cst_75 : f32 to vector<8x1xf32>
    %179 = arith.divf %177, %178 : vector<8x1xf32>
    %cst_76 = arith.constant 9.99999974E-6 : f32
    %180 = vector.broadcast %cst_76 : f32 to vector<8x1xf32>
    %181 = arith.addf %179, %180 : vector<8x1xf32>
    %182 = math.rsqrt %181 : vector<8x1xf32>
    %c0_77 = arith.constant 0 : index
    %c0_78 = arith.constant 0 : index
    %183 = vector.load %arg4[%c0_77, %c0_78] : memref<8x4xf32, #tpu.memory_space<vmem>>, vector<8x1xf32>
    %c0_79 = arith.constant 0 : index
    %c1_80 = arith.constant 1 : index
    %184 = vector.load %arg4[%c0_79, %c1_80] : memref<8x4xf32, #tpu.memory_space<vmem>>, vector<8x1xf32>
    %c0_81 = arith.constant 0 : index
    %c2_82 = arith.constant 2 : index
    %185 = vector.load %arg4[%c0_81, %c2_82] : memref<8x4xf32, #tpu.memory_space<vmem>>, vector<8x1xf32>
    %c0_83 = arith.constant 0 : index
    %c3_84 = arith.constant 3 : index
    %186 = vector.load %arg4[%c0_83, %c3_84] : memref<8x4xf32, #tpu.memory_space<vmem>>, vector<8x1xf32>
    %187 = arith.mulf %183, %182 : vector<8x1xf32>
    %188 = arith.mulf %172, %187 : vector<8x1xf32>
    %189 = arith.subf %184, %188 : vector<8x1xf32>
    %190 = tpu.iota {dimensions = array<i32: 0>} : vector<8x1xi32>
    %c4_i32 = arith.constant 4 : i32
    %191 = vector.broadcast %c4_i32 : i32 to vector<8x1xi32>
    %192 = arith.cmpi slt, %190, %191 : vector<8x1xi32>
    %193 = arith.select %192, %187, %185 : vector<8x1xi1>, vector<8x1xf32>
    %194 = arith.select %192, %189, %186 : vector<8x1xi1>, vector<8x1xf32>
    %195 = vector.broadcast %193 : vector<8x1xf32> to vector<8x256xf32>
    %196 = arith.mulf %168, %195 : vector<8x256xf32>
    %197 = vector.broadcast %194 : vector<8x1xf32> to vector<8x256xf32>
    %198 = arith.addf %196, %197 : vector<8x256xf32>
    %199 = arith.negf %198 : vector<8x256xf32>
    %200 = math.exp %199 : vector<8x256xf32>
    %cst_85 = arith.constant 1.000000e+00 : f32
    %201 = vector.broadcast %cst_85 : f32 to vector<8x256xf32>
    %202 = arith.addf %201, %200 : vector<8x256xf32>
    %203 = arith.divf %201, %202 : vector<8x256xf32>
    %204 = arith.mulf %198, %203 : vector<8x256xf32>
    %c0_86 = arith.constant 0 : index
    %c0_87 = arith.constant 0 : index
    %c0_88 = arith.constant 0 : index
    %205 = vector.load %arg5[%c0_86, %c0_87, %c0_88] : memref<1x8x256xf32, #tpu.memory_space<vmem>>, vector<1x8x256xf32>
    %206 = vector.shape_cast %205 : vector<1x8x256xf32> to vector<8x256xf32>
    %207 = vector.shape_cast %204 : vector<8x256xf32> to vector<1x8x256xf32>
    tpu.vector_store %arg5[%c0_86, %c0_87, %c0_88], %207 {strides = array<i32>} : memref<1x8x256xf32, #tpu.memory_space<vmem>>, vector<1x8x256xf32>,
    return
  }
  func.func @transform_0(%arg0: i32) -> (i32, i32, i32) {
    %c0_i32 = arith.constant 0 : i32
    %c0_i32_0 = arith.constant 0 : i32
    %c0_i32_1 = arith.constant 0 : i32
    return %arg0, %c0_i32, %c0_i32_0 : i32, i32, i32
  }
  func.func @transform_1(%arg0: i32) -> (i32, i32, i32) {
    %c0_i32 = arith.constant 0 : i32
    %c0_i32_0 = arith.constant 0 : i32
    %c0_i32_1 = arith.constant 0 : i32
    %c0_i32_2 = arith.constant 0 : i32
    return %c0_i32, %c0_i32_0, %c0_i32_1 : i32, i32, i32
  }
  func.func @transform_2(%arg0: i32) -> (i32, i32) {
    %c0_i32 = arith.constant 0 : i32
    %c0_i32_0 = arith.constant 0 : i32
    %c0_i32_1 = arith.constant 0 : i32
    return %c0_i32, %c0_i32_0 : i32, i32
  }
  func.func @transform_3(%arg0: i32) -> (i32, i32) {
    %c0_i32 = arith.constant 0 : i32
    %c0_i32_0 = arith.constant 0 : i32
    %c0_i32_1 = arith.constant 0 : i32
    return %c0_i32, %c0_i32_0 : i32, i32
  }
  func.func @transform_4(%arg0: i32) -> (i32, i32, i32) {
    %c0_i32 = arith.constant 0 : i32
    %c0_i32_0 = arith.constant 0 : i32
    %c0_i32_1 = arith.constant 0 : i32
    return %arg0, %c0_i32, %c0_i32_0 : i32, i32, i32
  }
}

</mosaic_0001>

<llo_original>
// kernel: tpu_custom_call.1
$region0: #{tpu_custom_call.1}
  #allocation0 [shape = 'u32[]', space=smem, size = 0x4, offset = 0x4, fixed_abs, tag = 'smem constant byte address 0x4 - core index']
  #allocation1 [shape = 'u32[144,128]{1,0:T(1,128)}', space=vmem, size = 0x12000, scoped, tag = 'internal scratch']
  %s0 = inlined_call_operand.vmem [shape: f32[2,4,256], index: 0, kind: input, shape index: {}]
  %s1 = inlined_call_operand.vmem [shape: f32[9,8,4], index: 1, kind: input, shape index: {}]
  %s2 = inlined_call_operand.vmem [shape: s32[2,256], index: 2, kind: input, shape index: {}]
  %s3 = inlined_call_operand.vmem [shape: f32[8,4], index: 3, kind: input, shape index: {}]
  %s4 = inlined_call_operand.hbm [shape: f32[2,8,256], index: 4, kind: output, shape index: {}]
  %s5 = sld [smem:[#allocation0]]
  $region49: #{tpu_custom_call.1} parent=0
    _
  %s7 = ssub.s32 1, %s5
  %s8 = scalar_select 0, %s7, %s5
  $region1: #{tpu_custom_call.1} parent=0
    #allocation2 [shape = 'u8[16384]{0}', space=vmem, size = 0x4000, scoped, tag = 'output window, operand 0']
    #allocation3 [shape = 's32[2]{0}', space=sflag, size = 0x8, scoped, tag = 'scoped memory for tpu_custom_call.1']
    %9 = vsyncpa [#allocation3], 0
    %s10 = scalar_lea.sflag [#allocation3], 1
    %11 = vsyncpa %s10, 0
    loop: start=0, step=1, limit=4
    $region2: #{tpu_custom_call.1} parent=1 // loop_pre_header
      _
    $region3: #{tpu_custom_call.1} parent=1 // loop_header
      %s13 = sphi 0, %s17
      %p14 = scmp.ge.s32.totalorder %s13, 4
      %s23 = sphi 0, %s25
      %s26 = sphi 0, %s23
      %s27 = sphi 0, %s26
      %s43 = sphi 0, %s27
      %s47 = sphi 0, %s47
      %s49 = sphi 0, %s47
      %s50 = sphi 0, %s49
      %s64 = sphi 0, %s50
      %s68 = sphi 0, %s68
      %s70 = sphi 0, %s68
      %s71 = sphi 0, %s70
      %s85 = sphi 0, %s71
      %s89 = sphi 0, %s89
      %s91 = sphi 0, %s89
      %s92 = sphi 0, %s91
      %s106 = sphi 0, %s92
      %s112 = sphi 0, %s114
      %s115 = sphi 0, %s112
      %s116 = sphi 0, %s115
      %s132 = sphi 0, %s116
    $region4: #{tpu_custom_call.1} parent=1 // loop_header_branch
      %16 = sbr.rel (%p14) target = $region8
    $region5: #{tpu_custom_call.1} parent=1 // loop_body
      %s18 = ssub.s32 %s13, 1
      %s19 = ssub.s32 %s13, 2
      %s20 = sadd.s32 %s13, 1
      %s21 = ssub.s32 %s13, %s20
      %p22 = scmp.eq.s32.totalorder %s21, 0
      %s24 = sadd.s32 %s23, 1
      %s25 = scalar_select %p22, %s23, %s24
      %p28 = pneg %p22
      %p29 = scmp.eq.s32.totalorder %s13, 1
      %p30 = por %p28, %p29
      %p31 = scmp.ne.s32.totalorder %s23, %s26
      %p32 = scmp.eq.s32.totalorder %s13, 0
      %p33 = por %p31, %p32
      %p34 = scmp.ne.s32.totalorder %s23, %s26
      %p35 = scmp.eq.s32.totalorder %s18, 1
      %p36 = por %p34, %p35
      %p37 = scmp.ne.s32.totalorder %s26, %s27
      %p38 = scmp.eq.s32.totalorder %s18, 0
      %p39 = por %p37, %p38
      %p40 = scmp.ne.s32.totalorder %s26, %s27
      %p41 = scmp.eq.s32.totalorder %s19, 1
      %p42 = por %p40, %p41
      %p44 = scmp.ne.s32.totalorder %s27, %s43
      %p45 = scmp.eq.s32.totalorder %s19, 0
      %p46 = por %p44, %p45
      %s48 = sadd.s32 %s47, 1
      %p51 = scmp.eq.s32.totalorder %s13, 1
      %p52 = scmp.ne.s32.totalorder %s47, %s49
      %p53 = scmp.eq.s32.totalorder %s13, 0
      %p54 = por %p52, %p53
      %p55 = scmp.ne.s32.totalorder %s47, %s49
      %p56 = scmp.eq.s32.totalorder %s18, 1
      %p57 = por %p55, %p56
      %p58 = scmp.ne.s32.totalorder %s49, %s50
      %p59 = scmp.eq.s32.totalorder %s18, 0
      %p60 = por %p58, %p59
      %p61 = scmp.ne.s32.totalorder %s49, %s50
      %p62 = scmp.eq.s32.totalorder %s19, 1
      %p63 = por %p61, %p62
      %p65 = scmp.ne.s32.totalorder %s50, %s64
      %p66 = scmp.eq.s32.totalorder %s19, 0
      %p67 = por %p65, %p66
      %s69 = sadd.s32 %s68, 1
      %p72 = scmp.eq.s32.totalorder %s13, 1
      %p73 = scmp.ne.s32.totalorder %s68, %s70
      %p74 = scmp.eq.s32.totalorder %s13, 0
      %p75 = por %p73, %p74
      %p76 = scmp.ne.s32.totalorder %s68, %s70
      %p77 = scmp.eq.s32.totalorder %s18, 1
      %p78 = por %p76, %p77
      %p79 = scmp.ne.s32.totalorder %s70, %s71
      %p80 = scmp.eq.s32.totalorder %s18, 0
      %p81 = por %p79, %p80
      %p82 = scmp.ne.s32.totalorder %s70, %s71
      %p83 = scmp.eq.s32.totalorder %s19, 1
      %p84 = por %p82, %p83
      %p86 = scmp.ne.s32.totalorder %s71, %s85
      %p87 = scmp.eq.s32.totalorder %s19, 0
      %p88 = por %p86, %p87
      %s90 = sadd.s32 %s89, 1
      %p93 = scmp.eq.s32.totalorder %s13, 1
      %p94 = scmp.ne.s32.totalorder %s89, %s91
      %p95 = scmp.eq.s32.totalorder %s13, 0
      %p96 = por %p94, %p95
      %p97 = scmp.ne.s32.totalorder %s89, %s91
      %p98 = scmp.eq.s32.totalorder %s18, 1
      %p99 = por %p97, %p98
      %p100 = scmp.ne.s32.totalorder %s91, %s92
      %p101 = scmp.eq.s32.totalorder %s18, 0
      %p102 = por %p100, %p101
      %p103 = scmp.ne.s32.totalorder %s91, %s92
      %p104 = scmp.eq.s32.totalorder %s19, 1
      %p105 = por %p103, %p104
      %p107 = scmp.ne.s32.totalorder %s92, %s106
      %p108 = scmp.eq.s32.totalorder %s19, 0
      %p109 = por %p107, %p108
      %s110 = ssub.s32 %s13, %s20
      %p111 = scmp.eq.s32.totalorder %s110, 0
      %s113 = sadd.s32 %s112, 1
      %s114 = scalar_select %p111, %s112, %s113
      %p117 = pneg %p111
      %p118 = scmp.eq.s32.totalorder %s13, 1
      %p119 = por %p117, %p118
      %p120 = scmp.ne.s32.totalorder %s112, %s115
      %p121 = scmp.eq.s32.totalorder %s13, 0
      %p122 = por %p120, %p121
      %p123 = scmp.ne.s32.totalorder %s112, %s115
      %p124 = scmp.eq.s32.totalorder %s18, 1
      %p125 = por %p123, %p124
      %p126 = scmp.ne.s32.totalorder %s115, %s116
      %p127 = scmp.eq.s32.totalorder %s18, 0
      %p128 = por %p126, %p127
      %p129 = scmp.ne.s32.totalorder %s115, %s116
      %p130 = scmp.eq.s32.totalorder %s19, 1
      %p131 = por %p129, %p130
      %p133 = scmp.ne.s32.totalorder %s116, %s132
      %p134 = scmp.eq.s32.totalorder %s19, 0
      %p135 = por %p133, %p134
      %p136 = scmp.le.s32.totalorder 1, %s13
      %p137 = scmp.lt.s32.totalorder %s13, 3
      %p138 = pnand %p136, %p137
      %p139 = pneg %p138
      // Predicated region
      $region9: #{tpu_custom_call.1} parent=5 // pred_check
        _
      $region10: #{tpu_custom_call.1} parent=5 // pred_check_branch
        %141 = sbr.rel (%p138) target = $region12
      $region11: #{tpu_custom_call.1} parent=5 // pred_region
        %s142 = ssub.s32 %s13, 1
        // Predicated region
        $region13: #{tpu_custom_call.1} parent=11 // pred_check
          %p143 = pneg %p60
        $region14: #{tpu_custom_call.1} parent=11 // pred_check_branch
          %145 = sbr.rel (%p143) target = $region16
        $region15: #{tpu_custom_call.1} parent=11 // pred_region
          _
        $region16: #{tpu_custom_call.1} parent=11 // pred_fallthru
          _
        // Predicated region
        $region17: #{tpu_custom_call.1} parent=11 // pred_check
          %p146 = pneg %p81
        $region18: #{tpu_custom_call.1} parent=11 // pred_check_branch
          %148 = sbr.rel (%p146) target = $region20
        $region19: #{tpu_custom_call.1} parent=11 // pred_region
          _
        $region20: #{tpu_custom_call.1} parent=11 // pred_fallthru
          _
        // Predicated region
        $region21: #{tpu_custom_call.1} parent=11 // pred_check
          %p149 = pneg %p102
        $region22: #{tpu_custom_call.1} parent=11 // pred_check_branch
          %151 = sbr.rel (%p149) target = $region24
        $region23: #{tpu_custom_call.1} parent=11 // pred_region
          _
        $region24: #{tpu_custom_call.1} parent=11 // pred_fallthru
          _
      $region12: #{tpu_custom_call.1} parent=5 // pred_fallthru
        _
      %p152 = scmp.lt.s32.totalorder %s13, 2
      // Predicated region
      $region25: #{tpu_custom_call.1} parent=5 // pred_check
        %p153 = pneg %p152
      $region26: #{tpu_custom_call.1} parent=5 // pred_check_branch
        %155 = sbr.rel (%p153) target = $region28
      $region27: #{tpu_custom_call.1} parent=5 // pred_region
        // Predicated region
        $region29: #{tpu_custom_call.1} parent=27 // pred_check
          %p156 = pneg %p33
        $region30: #{tpu_custom_call.1} parent=27 // pred_check_branch
          %158 = sbr.rel (%p156) target = $region32
        $region31: #{tpu_custom_call.1} parent=27 // pred_region
          %p159 = scmp.lt.s32.totalorder %s13, 1
          %s160 = scalar_select %p159, %s13, 1
          %s161 = smul.addr %s160, 2
          %s162 = smul.addr %s161, 4
          %s163 = scalar_lea.vmem %s0, %s162
        $region32: #{tpu_custom_call.1} parent=27 // pred_fallthru
          _
      $region28: #{tpu_custom_call.1} parent=5 // pred_fallthru
        _
      %p164 = scmp.le.s32.totalorder 1, %s13
      %p165 = scmp.lt.s32.totalorder %s13, 3
      %p166 = pnand %p164, %p165
      %p167 = pneg %p166
      // Predicated region
      $region33: #{tpu_custom_call.1} parent=5 // pred_check
        _
      $region34: #{tpu_custom_call.1} parent=5 // pred_check_branch
        %169 = sbr.rel (%p166) target = $region36
      $region35: #{tpu_custom_call.1} parent=5 // pred_region
        %s170 = ssub.s32 %s13, 1
        %p171 = scmp.lt.s32.totalorder %s18, 1
        %s172 = scalar_select %p171, %s18, 1
        %s173 = smul.addr %s172, 2
        %s174 = smul.addr %s173, 4
        %s175 = scalar_lea.vmem %s0, %s174
        %p176 = pneg %p39
        %p177 = pneg %p36
        %p178 = pneg %p60
        %p179 = pneg %p57
        %p180 = pneg %p81
        %p181 = pneg %p78
        %p182 = pneg %p102
        %p183 = pneg %p99
        %p184 = pneg %p128
        %p185 = pneg %p125
        %s186 = sand.u32 %s115, 1
        %s187 = scalar_lea.sflag [#allocation3], %s186
        %s188 = sand.u32 %s115, 1
        %s189 = smul.addr %s188, 16
        %s190 = scalar_lea.vmem [#allocation2], %s189
        %p191 = scmp.lt.s32.totalorder %s18, 1
        %s192 = scalar_select %p191, %s18, 1
        %s193 = smul.addr %s192, 2
        %s194 = smul.addr %s193, 4
        %s195 = scalar_lea.vmem %s0, %s194
        %v196 = vld [vmem:[%s195] sm:$0xff]
        %v197 = vld [vmem:[%s2] ss:$2 sm:$0x3]
        %s198 = scalar_lea.vmem %s2, 1
        %v199 = vld [vmem:[%s198] ss:$2 sm:$0x3]
        %v201 = vcombine.high %v196, %v196
        %203 = vrot.lane.b32.xlu0 %v196, 17
        %v204 = vpop.permute.xlu0 %203
        %205 = vrot.lane.b32.xlu0 %v201, 17
        %v206 = vpop.permute.xlu0 %205
        %v207 = vlaneseq
        %v208 = vand.u32 %v207, 127
        %vm209 = vcmp.lt.s32.totalorder %v208, 17
        %v210 = vsel %vm209, %v204, %v206
        %v211 = vsel %vm209, %v206, %v204
        %vm212 = vcmp.ge.s32.totalorder %v197, 1
        %vm213 = vcmp.lt.s32.totalorder %v197, 17
        %vm214 = vmand %vm212, %vm213
        %vm215 = vcmp.ge.s32.totalorder %v199, 1
        %vm216 = vmand %vm214, %vm215
        %vm217 = vcmp.lt.s32.totalorder %v199, 17
        %vm218 = vmand %vm216, %vm217
        %v219 = vsel %vm218, 1, 0
        %v220 = vlaneseq
        %v221 = vshrl.u32 %v220, 7
        %v222 = vsub.s32 0, %v221
        %v223 = vrot.slane %v219, %v222
        %v224 = vlaneseq
        %v225 = vshrl.u32 %v224, 7
        %v226 = vsub.s32 1, %v225
        %v227 = vrot.slane %v219, %v226
        %vm228 = vcmp.eq.s32.totalorder %v223, 1
        %vm229 = vcmp.eq.s32.totalorder %v227, 1
        %v230 = vsel %vm228, %v211, 0.0
        %v231 = vsel %vm229, %v210, 0.0
        %v232 = vld [vmem:[%s1] sm:$0xff]
        %233 = vrot.lane.b32.xlu0 %v196, 16
        %v234 = vpop.permute.xlu0 %233
        %235 = vrot.lane.b32.xlu0 %v201, 16
        %v236 = vpop.permute.xlu0 %235
        %vm237 = vcmp.lt.s32.totalorder %v208, 16
        %v238 = vsel %vm237, %v234, %v236
        %v239 = vsel %vm237, %v236, %v234
        %vm240 = vcmp.ge.s32.totalorder %v199, 0
        %vm241 = vmand %vm214, %vm240
        %vm242 = vcmp.lt.s32.totalorder %v199, 16
        %vm243 = vmand %vm241, %vm242
        %v244 = vsel %vm243, 1, 0
        %v245 = vlaneseq
        %v246 = vshrl.u32 %v245, 7
        %v247 = vsub.s32 0, %v246
        %v248 = vrot.slane %v244, %v247
        %v249 = vlaneseq
        %v250 = vshrl.u32 %v249, 7
        %v251 = vsub.s32 1, %v250
        %v252 = vrot.slane %v244, %v251
        %vm253 = vcmp.eq.s32.totalorder %v248, 1
        %vm254 = vcmp.eq.s32.totalorder %v252, 1
        %v255 = vsel %vm253, %v239, 0.0
        %v256 = vsel %vm254, %v238, 0.0
        %s257 = scalar_lea.vmem %s1, 8
        %v258 = vld [vmem:[%s257] sm:$0xff]
        %vm259 = vcmask 31744
        %v261 = vsel %vm259, %v258, 0
        %vm263 = vcmask 1043456
        %v265 = vsel %vm263, %v255, 0
        %v268 = vsel %vm263, %v256, 0
        %270 = vmatprep.subr.mxu0 0.0
        %271 = vmatpush1.msra.mxu0 0.0
        %272 = vmatprep.subr.mxu0 0.0
        %273 = vmatpush1.msra.mxu0 0.0
        %274 = vmatprep.subr.mxu0 0.0
        %275 = vmatpush1.msra.mxu0 0.0
        %276 = vmatprep.subr.mxu0 0.0
        %277 = vmatpush1.msra.mxu0 0.0
        %278 = vmatprep.subr.mxu0 0.0
        %279 = vmatpush1.msra.mxu0 0.0
        %280 = vmatprep.subr.mxu0 0.0
        %281 = vmatpush1.msra.mxu0 0.0
        %282 = vmatprep.subr.mxu0 0.0
        %283 = vmatpush1.msra.mxu0 0.0
        %284 = vmatprep.subr.mxu0 0.0
        %285 = vmatpush1.msra.mxu0 0.0
        %286 = vmatprep.subr.mxu0 0.0
        %287 = vmatpush1.msra.mxu0 0.0
        %288 = vmatprep.subr.mxu0 0.0
        %289 = vmatpush1.msra.mxu0 0.0
        %290 = vmatprep.subr.mxu0 0.0
        %291 = vmatpush1.msra.mxu0 0.0
        %292 = vmatprep.subr.mxu0 0.0
        %293 = vmatpush1.msra.mxu0 0.0
        %294 = vmatprep.subr.mxu0 0.0
        %295 = vmatpush1.msra.mxu0 0.0
        %296 = vmatprep.subr.mxu0 0.0
        %297 = vmatpush1.msra.mxu0 0.0
        %298 = vmatprep.subr.mxu0 0.0
        %299 = vmatpush1.msra.mxu0 0.0
        %300 = vmatprep.subr.mxu0 %v268
        %301 = vmatpush1.msra.mxu0 %v265
        %302 = vmatprep.subr.mxu0 0.0
        %303 = vmatpush2.msra.mxu0 0.0
        %304 = vmatprep.subr.mxu0 0.0
        %305 = vmatpush2.msra.mxu0 0.0
        %306 = vmatprep.subr.mxu0 0.0
        %307 = vmatpush2.msra.mxu0 0.0
        %308 = vmatprep.subr.mxu0 0.0
        %309 = vmatpush2.msra.mxu0 0.0
        %310 = vmatprep.subr.mxu0 0.0
        %311 = vmatpush2.msra.mxu0 0.0
        %312 = vmatprep.subr.mxu0 0.0
        %313 = vmatpush2.msra.mxu0 0.0
        %314 = vmatprep.subr.mxu0 0.0
        %315 = vmatpush2.msra.mxu0 0.0
        %316 = vmatprep.subr.mxu0 0.0
        %317 = vmatpush2.msra.mxu0 0.0
        %318 = vmatprep.subr.mxu0 0.0
        %319 = vmatpush2.msra.mxu0 0.0
        %320 = vmatprep.subr.mxu0 0.0
        %321 = vmatpush2.msra.mxu0 0.0
        %322 = vmatprep.subr.mxu0 0.0
        %323 = vmatpush2.msra.mxu0 0.0
        %324 = vmatprep.subr.mxu0 0.0
        %325 = vmatpush2.msra.mxu0 0.0
        %326 = vmatprep.subr.mxu0 0.0
        %327 = vmatpush2.msra.mxu0 0.0
        %328 = vmatprep.subr.mxu0 0.0
        %329 = vmatpush2.msra.mxu0 0.0
        %330 = vmatprep.subr.mxu0 0.0
        %331 = vmatpush2.msra.mxu0 0.0
        %332 = vmatprep.subr.mxu0 0.0
        %333 = vmatpush2.msra.mxu0 0.0
        %334 = vmatprep.mubr.f32.mxu0 0.0
        %335 = vmatmul.mubr.f32.gmra.mxu0 %v261
        %v336 = vpop.f32.mrf.mxu0
        %v337 = vadd.f32 0.0, %v336
        %v338 = vpop.f32.mrf.mxu0
        %v339 = vadd.f32 0.0, %v338
        %340 = vdwg.mxu0
        %v342 = vsel %vm259, %v232, 0
        %v345 = vsel %vm263, %v230, 0
        %v348 = vsel %vm263, %v231, 0
        %350 = vmatprep.subr.mxu0 0.0
        %351 = vmatpush1.msra.mxu0 0.0
        %352 = vmatprep.subr.mxu0 0.0
        %353 = vmatpush1.msra.mxu0 0.0
        %354 = vmatprep.subr.mxu0 0.0
        %355 = vmatpush1.msra.mxu0 0.0
        %356 = vmatprep.subr.mxu0 0.0
        %357 = vmatpush1.msra.mxu0 0.0
        %358 = vmatprep.subr.mxu0 0.0
        %359 = vmatpush1.msra.mxu0 0.0
        %360 = vmatprep.subr.mxu0 0.0
        %361 = vmatpush1.msra.mxu0 0.0
        %362 = vmatprep.subr.mxu0 0.0
        %363 = vmatpush1.msra.mxu0 0.0
        %364 = vmatprep.subr.mxu0 0.0
        %365 = vmatpush1.msra.mxu0 0.0
        %366 = vmatprep.subr.mxu0 0.0
        %367 = vmatpush1.msra.mxu0 0.0
        %368 = vmatprep.subr.mxu0 0.0
        %369 = vmatpush1.msra.mxu0 0.0
        %370 = vmatprep.subr.mxu0 0.0
        %371 = vmatpush1.msra.mxu0 0.0
        %372 = vmatprep.subr.mxu0 0.0
        %373 = vmatpush1.msra.mxu0 0.0
        %374 = vmatprep.subr.mxu0 0.0
        %375 = vmatpush1.msra.mxu0 0.0
        %376 = vmatprep.subr.mxu0 0.0
        %377 = vmatpush1.msra.mxu0 0.0
        %378 = vmatprep.subr.mxu0 0.0
        %379 = vmatpush1.msra.mxu0 0.0
        %380 = vmatprep.subr.mxu0 %v348
        %381 = vmatpush1.msra.mxu0 %v345
        %382 = vmatprep.subr.mxu0 0.0
        %383 = vmatpush2.msra.mxu0 0.0
        %384 = vmatprep.subr.mxu0 0.0
        %385 = vmatpush2.msra.mxu0 0.0
        %386 = vmatprep.subr.mxu0 0.0
        %387 = vmatpush2.msra.mxu0 0.0
        %388 = vmatprep.subr.mxu0 0.0
        %389 = vmatpush2.msra.mxu0 0.0
        %390 = vmatprep.subr.mxu0 0.0
        %391 = vmatpush2.msra.mxu0 0.0
        %392 = vmatprep.subr.mxu0 0.0
        %393 = vmatpush2.msra.mxu0 0.0
        %394 = vmatprep.subr.mxu0 0.0
        %395 = vmatpush2.msra.mxu0 0.0
        %396 = vmatprep.subr.mxu0 0.0
        %397 = vmatpush2.msra.mxu0 0.0
        %398 = vmatprep.subr.mxu0 0.0
        %399 = vmatpush2.msra.mxu0 0.0
        %400 = vmatprep.subr.mxu0 0.0
        %401 = vmatpush2.msra.mxu0 0.0
        %402 = vmatprep.subr.mxu0 0.0
        %403 = vmatpush2.msra.mxu0 0.0
        %404 = vmatprep.subr.mxu0 0.0
        %405 = vmatpush2.msra.mxu0 0.0
        %406 = vmatprep.subr.mxu0 0.0
        %407 = vmatpush2.msra.mxu0 0.0
        %408 = vmatprep.subr.mxu0 0.0
        %409 = vmatpush2.msra.mxu0 0.0
        %410 = vmatprep.subr.mxu0 0.0
        %411 = vmatpush2.msra.mxu0 0.0
        %412 = vmatprep.subr.mxu0 0.0
        %413 = vmatpush2.msra.mxu0 0.0
        %414 = vmatprep.mubr.f32.mxu0 0.0
        %415 = vmatmul.mubr.f32.gmra.mxu0 %v342
        %v416 = vpop.f32.mrf.mxu0
        %v417 = vadd.f32 %v337, %v416
        %v418 = vpop.f32.mrf.mxu0
        %v419 = vadd.f32 %v339, %v418
        %420 = vdwg.mxu0
        %421 = vrot.lane.b32.xlu0 %v196, 15
        %v422 = vpop.permute.xlu0 %421
        %423 = vrot.lane.b32.xlu0 %v201, 15
        %v424 = vpop.permute.xlu0 %423
        %vm425 = vcmp.lt.s32.totalorder %v208, 15
        %v426 = vsel %vm425, %v422, %v424
        %v427 = vsel %vm425, %v424, %v422
        %vm428 = vcmp.ge.s32.totalorder %v199, 4294967295
        %vm429 = vmand %vm214, %vm428
        %vm430 = vcmp.lt.s32.totalorder %v199, 15
        %vm431 = vmand %vm429, %vm430
        %v432 = vsel %vm431, 1, 0
        %v433 = vlaneseq
        %v434 = vshrl.u32 %v433, 7
        %v435 = vsub.s32 0, %v434
        %v436 = vrot.slane %v432, %v435
        %v437 = vlaneseq
        %v438 = vshrl.u32 %v437, 7
        %v439 = vsub.s32 1, %v438
        %v440 = vrot.slane %v432, %v439
        %vm441 = vcmp.eq.s32.totalorder %v436, 1
        %vm442 = vcmp.eq.s32.totalorder %v440, 1
        %v443 = vsel %vm441, %v427, 0.0
        %v444 = vsel %vm442, %v426, 0.0
        %s445 = scalar_lea.vmem %s1, 16
        %v446 = vld [vmem:[%s445] sm:$0xff]
        %v448 = vsel %vm259, %v446, 0
        %v451 = vsel %vm263, %v443, 0
        %v454 = vsel %vm263, %v444, 0
        %456 = vmatprep.subr.mxu0 0.0
        %457 = vmatpush1.msra.mxu0 0.0
        %458 = vmatprep.subr.mxu0 0.0
        %459 = vmatpush1.msra.mxu0 0.0
        %460 = vmatprep.subr.mxu0 0.0
        %461 = vmatpush1.msra.mxu0 0.0
        %462 = vmatprep.subr.mxu0 0.0
        %463 = vmatpush1.msra.mxu0 0.0
        %464 = vmatprep.subr.mxu0 0.0
        %465 = vmatpush1.msra.mxu0 0.0
        %466 = vmatprep.subr.mxu0 0.0
        %467 = vmatpush1.msra.mxu0 0.0
        %468 = vmatprep.subr.mxu0 0.0
        %469 = vmatpush1.msra.mxu0 0.0
        %470 = vmatprep.subr.mxu0 0.0
        %471 = vmatpush1.msra.mxu0 0.0
        %472 = vmatprep.subr.mxu0 0.0
        %473 = vmatpush1.msra.mxu0 0.0
        %474 = vmatprep.subr.mxu0 0.0
        %475 = vmatpush1.msra.mxu0 0.0
        %476 = vmatprep.subr.mxu0 0.0
        %477 = vmatpush1.msra.mxu0 0.0
        %478 = vmatprep.subr.mxu0 0.0
        %479 = vmatpush1.msra.mxu0 0.0
        %480 = vmatprep.subr.mxu0 0.0
        %481 = vmatpush1.msra.mxu0 0.0
        %482 = vmatprep.subr.mxu0 0.0
        %483 = vmatpush1.msra.mxu0 0.0
        %484 = vmatprep.subr.mxu0 0.0
        %485 = vmatpush1.msra.mxu0 0.0
        %486 = vmatprep.subr.mxu0 %v454
        %487 = vmatpush1.msra.mxu0 %v451
        %488 = vmatprep.subr.mxu0 0.0
        %489 = vmatpush2.msra.mxu0 0.0
        %490 = vmatprep.subr.mxu0 0.0
        %491 = vmatpush2.msra.mxu0 0.0
        %492 = vmatprep.subr.mxu0 0.0
        %493 = vmatpush2.msra.mxu0 0.0
        %494 = vmatprep.subr.mxu0 0.0
        %495 = vmatpush2.msra.mxu0 0.0
        %496 = vmatprep.subr.mxu0 0.0
        %497 = vmatpush2.msra.mxu0 0.0
        %498 = vmatprep.subr.mxu0 0.0
        %499 = vmatpush2.msra.mxu0 0.0
        %500 = vmatprep.subr.mxu0 0.0
        %501 = vmatpush2.msra.mxu0 0.0
        %502 = vmatprep.subr.mxu0 0.0
        %503 = vmatpush2.msra.mxu0 0.0
        %504 = vmatprep.subr.mxu0 0.0
        %505 = vmatpush2.msra.mxu0 0.0
        %506 = vmatprep.subr.mxu0 0.0
        %507 = vmatpush2.msra.mxu0 0.0
        %508 = vmatprep.subr.mxu0 0.0
        %509 = vmatpush2.msra.mxu0 0.0
        %510 = vmatprep.subr.mxu0 0.0
        %511 = vmatpush2.msra.mxu0 0.0
        %512 = vmatprep.subr.mxu0 0.0
        %513 = vmatpush2.msra.mxu0 0.0
        %514 = vmatprep.subr.mxu0 0.0
        %515 = vmatpush2.msra.mxu0 0.0
        %516 = vmatprep.subr.mxu0 0.0
        %517 = vmatpush2.msra.mxu0 0.0
        %518 = vmatprep.subr.mxu0 0.0
        %519 = vmatpush2.msra.mxu0 0.0
        %520 = vmatprep.mubr.f32.mxu0 0.0
        %521 = vmatmul.mubr.f32.gmra.mxu0 %v448
        %v522 = vpop.f32.mrf.mxu0
        %v523 = vadd.f32 0.0, %v522
        %v524 = vpop.f32.mrf.mxu0
        %v525 = vadd.f32 0.0, %v524
        %526 = vdwg.mxu0
        %v527 = vadd.f32 %v417, %v523
        %v528 = vadd.f32 %v419, %v525
        %529 = vrot.lane.b32.xlu0 %v196, 1
        %v530 = vpop.permute.xlu0 %529
        %531 = vrot.lane.b32.xlu0 %v201, 1
        %v532 = vpop.permute.xlu0 %531
        %vm533 = vcmp.lt.s32.totalorder %v208, 1
        %v534 = vsel %vm533, %v530, %v532
        %v535 = vsel %vm533, %v532, %v530
        %vm536 = vcmp.ge.s32.totalorder %v197, 0
        %vm537 = vcmp.lt.s32.totalorder %v197, 16
        %vm538 = vmand %vm536, %vm537
        %vm539 = vmand %vm538, %vm215
        %vm540 = vmand %vm539, %vm217
        %v541 = vsel %vm540, 1, 0
        %v542 = vlaneseq
        %v543 = vshrl.u32 %v542, 7
        %v544 = vsub.s32 0, %v543
        %v545 = vrot.slane %v541, %v544
        %v546 = vlaneseq
        %v547 = vshrl.u32 %v546, 7
        %v548 = vsub.s32 1, %v547
        %v549 = vrot.slane %v541, %v548
        %vm550 = vcmp.eq.s32.totalorder %v545, 1
        %vm551 = vcmp.eq.s32.totalorder %v549, 1
        %v552 = vsel %vm550, %v535, 0.0
        %v553 = vsel %vm551, %v534, 0.0
        %s554 = scalar_lea.vmem %s1, 24
        %v555 = vld [vmem:[%s554] sm:$0xff]
        %v557 = vsel %vm259, %v555, 0
        %v560 = vsel %vm263, %v552, 0
        %v563 = vsel %vm263, %v553, 0
        %565 = vmatprep.subr.mxu0 0.0
        %566 = vmatpush1.msra.mxu0 0.0
        %567 = vmatprep.subr.mxu0 0.0
        %568 = vmatpush1.msra.mxu0 0.0
        %569 = vmatprep.subr.mxu0 0.0
        %570 = vmatpush1.msra.mxu0 0.0
        %571 = vmatprep.subr.mxu0 0.0
        %572 = vmatpush1.msra.mxu0 0.0
        %573 = vmatprep.subr.mxu0 0.0
        %574 = vmatpush1.msra.mxu0 0.0
        %575 = vmatprep.subr.mxu0 0.0
        %576 = vmatpush1.msra.mxu0 0.0
        %577 = vmatprep.subr.mxu0 0.0
        %578 = vmatpush1.msra.mxu0 0.0
        %579 = vmatprep.subr.mxu0 0.0
        %580 = vmatpush1.msra.mxu0 0.0
        %581 = vmatprep.subr.mxu0 0.0
        %582 = vmatpush1.msra.mxu0 0.0
        %583 = vmatprep.subr.mxu0 0.0
        %584 = vmatpush1.msra.mxu0 0.0
        %585 = vmatprep.subr.mxu0 0.0
        %586 = vmatpush1.msra.mxu0 0.0
        %587 = vmatprep.subr.mxu0 0.0
        %588 = vmatpush1.msra.mxu0 0.0
        %589 = vmatprep.subr.mxu0 0.0
        %590 = vmatpush1.msra.mxu0 0.0
        %591 = vmatprep.subr.mxu0 0.0
        %592 = vmatpush1.msra.mxu0 0.0
        %593 = vmatprep.subr.mxu0 0.0
        %594 = vmatpush1.msra.mxu0 0.0
        %595 = vmatprep.subr.mxu0 %v563
        %596 = vmatpush1.msra.mxu0 %v560
        %597 = vmatprep.subr.mxu0 0.0
        %598 = vmatpush2.msra.mxu0 0.0
        %599 = vmatprep.subr.mxu0 0.0
        %600 = vmatpush2.msra.mxu0 0.0
        %601 = vmatprep.subr.mxu0 0.0
        %602 = vmatpush2.msra.mxu0 0.0
        %603 = vmatprep.subr.mxu0 0.0
        %604 = vmatpush2.msra.mxu0 0.0
        %605 = vmatprep.subr.mxu0 0.0
        %606 = vmatpush2.msra.mxu0 0.0
        %607 = vmatprep.subr.mxu0 0.0
        %608 = vmatpush2.msra.mxu0 0.0
        %609 = vmatprep.subr.mxu0 0.0
        %610 = vmatpush2.msra.mxu0 0.0
        %611 = vmatprep.subr.mxu0 0.0
        %612 = vmatpush2.msra.mxu0 0.0
        %613 = vmatprep.subr.mxu0 0.0
        %614 = vmatpush2.msra.mxu0 0.0
        %615 = vmatprep.subr.mxu0 0.0
        %616 = vmatpush2.msra.mxu0 0.0
        %617 = vmatprep.subr.mxu0 0.0
        %618 = vmatpush2.msra.mxu0 0.0
        %619 = vmatprep.subr.mxu0 0.0
        %620 = vmatpush2.msra.mxu0 0.0
        %621 = vmatprep.subr.mxu0 0.0
        %622 = vmatpush2.msra.mxu0 0.0
        %623 = vmatprep.subr.mxu0 0.0
        %624 = vmatpush2.msra.mxu0 0.0
        %625 = vmatprep.subr.mxu0 0.0
        %626 = vmatpush2.msra.mxu0 0.0
        %627 = vmatprep.subr.mxu0 0.0
        %628 = vmatpush2.msra.mxu0 0.0
        %629 = vmatprep.mubr.f32.mxu0 0.0
        %630 = vmatmul.mubr.f32.gmra.mxu0 %v557
        %v631 = vpop.f32.mrf.mxu0
        %v632 = vadd.f32 0.0, %v631
        %v633 = vpop.f32.mrf.mxu0
        %v634 = vadd.f32 0.0, %v633
        %635 = vdwg.mxu0
        %v636 = vadd.f32 %v527, %v632
        %v637 = vadd.f32 %v528, %v634
        %s638 = scalar_lea.vmem %s1, 32
        %v639 = vld [vmem:[%s638] sm:$0xff]
        %v641 = vsel %vm259, %v639, 0
        %v643 = vsel %vm263, %v196, 0
        %v645 = vsel %vm263, %v201, 0
        %647 = vmatprep.subr.mxu0 0.0
        %648 = vmatpush1.msra.mxu0 0.0
        %649 = vmatprep.subr.mxu0 0.0
        %650 = vmatpush1.msra.mxu0 0.0
        %651 = vmatprep.subr.mxu0 0.0
        %652 = vmatpush1.msra.mxu0 0.0
        %653 = vmatprep.subr.mxu0 0.0
        %654 = vmatpush1.msra.mxu0 0.0
        %655 = vmatprep.subr.mxu0 0.0
        %656 = vmatpush1.msra.mxu0 0.0
        %657 = vmatprep.subr.mxu0 0.0
        %658 = vmatpush1.msra.mxu0 0.0
        %659 = vmatprep.subr.mxu0 0.0
        %660 = vmatpush1.msra.mxu0 0.0
        %661 = vmatprep.subr.mxu0 0.0
        %662 = vmatpush1.msra.mxu0 0.0
        %663 = vmatprep.subr.mxu0 0.0
        %664 = vmatpush1.msra.mxu0 0.0
        %665 = vmatprep.subr.mxu0 0.0
        %666 = vmatpush1.msra.mxu0 0.0
        %667 = vmatprep.subr.mxu0 0.0
        %668 = vmatpush1.msra.mxu0 0.0
        %669 = vmatprep.subr.mxu0 0.0
        %670 = vmatpush1.msra.mxu0 0.0
        %671 = vmatprep.subr.mxu0 0.0
        %672 = vmatpush1.msra.mxu0 0.0
        %673 = vmatprep.subr.mxu0 0.0
        %674 = vmatpush1.msra.mxu0 0.0
        %675 = vmatprep.subr.mxu0 0.0
        %676 = vmatpush1.msra.mxu0 0.0
        %677 = vmatprep.subr.mxu0 %v645
        %678 = vmatpush1.msra.mxu0 %v643
        %679 = vmatprep.subr.mxu0 0.0
        %680 = vmatpush2.msra.mxu0 0.0
        %681 = vmatprep.subr.mxu0 0.0
        %682 = vmatpush2.msra.mxu0 0.0
        %683 = vmatprep.subr.mxu0 0.0
        %684 = vmatpush2.msra.mxu0 0.0
        %685 = vmatprep.subr.mxu0 0.0
        %686 = vmatpush2.msra.mxu0 0.0
        %687 = vmatprep.subr.mxu0 0.0
        %688 = vmatpush2.msra.mxu0 0.0
        %689 = vmatprep.subr.mxu0 0.0
        %690 = vmatpush2.msra.mxu0 0.0
        %691 = vmatprep.subr.mxu0 0.0
        %692 = vmatpush2.msra.mxu0 0.0
        %693 = vmatprep.subr.mxu0 0.0
        %694 = vmatpush2.msra.mxu0 0.0
        %695 = vmatprep.subr.mxu0 0.0
        %696 = vmatpush2.msra.mxu0 0.0
        %697 = vmatprep.subr.mxu0 0.0
        %698 = vmatpush2.msra.mxu0 0.0
        %699 = vmatprep.subr.mxu0 0.0
        %700 = vmatpush2.msra.mxu0 0.0
        %701 = vmatprep.subr.mxu0 0.0
        %702 = vmatpush2.msra.mxu0 0.0
        %703 = vmatprep.subr.mxu0 0.0
        %704 = vmatpush2.msra.mxu0 0.0
        %705 = vmatprep.subr.mxu0 0.0
        %706 = vmatpush2.msra.mxu0 0.0
        %707 = vmatprep.subr.mxu0 0.0
        %708 = vmatpush2.msra.mxu0 0.0
        %709 = vmatprep.subr.mxu0 0.0
        %710 = vmatpush2.msra.mxu0 0.0
        %711 = vmatprep.mubr.f32.mxu0 0.0
        %712 = vmatmul.mubr.f32.gmra.mxu0 %v641
        %v713 = vpop.f32.mrf.mxu0
        %v714 = vadd.f32 0.0, %v713
        %v715 = vpop.f32.mrf.mxu0
        %v716 = vadd.f32 0.0, %v715
        %717 = vdwg.mxu0
        %v718 = vadd.f32 %v636, %v714
        %v719 = vadd.f32 %v637, %v716
        %720 = vrot.lane.b32.xlu0 %v196, 127
        %v721 = vpop.permute.xlu0 %720
        %722 = vrot.lane.b32.xlu0 %v201, 127
        %v723 = vpop.permute.xlu0 %722
        %vm724 = vcmp.lt.s32.totalorder %v208, 127
        %v725 = vsel %vm724, %v721, %v723
        %v726 = vsel %vm724, %v723, %v721
        %vm727 = vmand %vm538, %vm428
        %vm728 = vmand %vm727, %vm430
        %v729 = vsel %vm728, 1, 0
        %v730 = vlaneseq
        %v731 = vshrl.u32 %v730, 7
        %v732 = vsub.s32 0, %v731
        %v733 = vrot.slane %v729, %v732
        %v734 = vlaneseq
        %v735 = vshrl.u32 %v734, 7
        %v736 = vsub.s32 1, %v735
        %v737 = vrot.slane %v729, %v736
        %vm738 = vcmp.eq.s32.totalorder %v733, 1
        %vm739 = vcmp.eq.s32.totalorder %v737, 1
        %v740 = vsel %vm738, %v725, 0.0
        %v741 = vsel %vm739, %v726, 0.0
        %s742 = scalar_lea.vmem %s1, 40
        %v743 = vld [vmem:[%s742] sm:$0xff]
        %v745 = vsel %vm259, %v743, 0
        %v748 = vsel %vm263, %v740, 0
        %v751 = vsel %vm263, %v741, 0
        %753 = vmatprep.subr.mxu0 0.0
        %754 = vmatpush1.msra.mxu0 0.0
        %755 = vmatprep.subr.mxu0 0.0
        %756 = vmatpush1.msra.mxu0 0.0
        %757 = vmatprep.subr.mxu0 0.0
        %758 = vmatpush1.msra.mxu0 0.0
        %759 = vmatprep.subr.mxu0 0.0
        %760 = vmatpush1.msra.mxu0 0.0
        %761 = vmatprep.subr.mxu0 0.0
        %762 = vmatpush1.msra.mxu0 0.0
        %763 = vmatprep.subr.mxu0 0.0
        %764 = vmatpush1.msra.mxu0 0.0
        %765 = vmatprep.subr.mxu0 0.0
        %766 = vmatpush1.msra.mxu0 0.0
        %767 = vmatprep.subr.mxu0 0.0
        %768 = vmatpush1.msra.mxu0 0.0
        %769 = vmatprep.subr.mxu0 0.0
        %770 = vmatpush1.msra.mxu0 0.0
        %771 = vmatprep.subr.mxu0 0.0
        %772 = vmatpush1.msra.mxu0 0.0
        %773 = vmatprep.subr.mxu0 0.0
        %774 = vmatpush1.msra.mxu0 0.0
        %775 = vmatprep.subr.mxu0 0.0
        %776 = vmatpush1.msra.mxu0 0.0
        %777 = vmatprep.subr.mxu0 0.0
        %778 = vmatpush1.msra.mxu0 0.0
        %779 = vmatprep.subr.mxu0 0.0
        %780 = vmatpush1.msra.mxu0 0.0
        %781 = vmatprep.subr.mxu0 0.0
        %782 = vmatpush1.msra.mxu0 0.0
        %783 = vmatprep.subr.mxu0 %v751
        %784 = vmatpush1.msra.mxu0 %v748
        %785 = vmatprep.subr.mxu0 0.0
        %786 = vmatpush2.msra.mxu0 0.0
        %787 = vmatprep.subr.mxu0 0.0
        %788 = vmatpush2.msra.mxu0 0.0
        %789 = vmatprep.subr.mxu0 0.0
        %790 = vmatpush2.msra.mxu0 0.0
        %791 = vmatprep.subr.mxu0 0.0
        %792 = vmatpush2.msra.mxu0 0.0
        %793 = vmatprep.subr.mxu0 0.0
        %794 = vmatpush2.msra.mxu0 0.0
        %795 = vmatprep.subr.mxu0 0.0
        %796 = vmatpush2.msra.mxu0 0.0
        %797 = vmatprep.subr.mxu0 0.0
        %798 = vmatpush2.msra.mxu0 0.0
        %799 = vmatprep.subr.mxu0 0.0
        %800 = vmatpush2.msra.mxu0 0.0
        %801 = vmatprep.subr.mxu0 0.0
        %802 = vmatpush2.msra.mxu0 0.0
        %803 = vmatprep.subr.mxu0 0.0
        %804 = vmatpush2.msra.mxu0 0.0
        %805 = vmatprep.subr.mxu0 0.0
        %806 = vmatpush2.msra.mxu0 0.0
        %807 = vmatprep.subr.mxu0 0.0
        %808 = vmatpush2.msra.mxu0 0.0
        %809 = vmatprep.subr.mxu0 0.0
        %810 = vmatpush2.msra.mxu0 0.0
        %811 = vmatprep.subr.mxu0 0.0
        %812 = vmatpush2.msra.mxu0 0.0
        %813 = vmatprep.subr.mxu0 0.0
        %814 = vmatpush2.msra.mxu0 0.0
        %815 = vmatprep.subr.mxu0 0.0
        %816 = vmatpush2.msra.mxu0 0.0
        %817 = vmatprep.mubr.f32.mxu0 0.0
        %818 = vmatmul.mubr.f32.gmra.mxu0 %v745
        %v819 = vpop.f32.mrf.mxu0
        %v820 = vadd.f32 0.0, %v819
        %v821 = vpop.f32.mrf.mxu0
        %v822 = vadd.f32 0.0, %v821
        %823 = vdwg.mxu0
        %v824 = vadd.f32 %v718, %v820
        %v825 = vadd.f32 %v719, %v822
        %826 = vrot.lane.b32.xlu0 %v196, 113
        %v827 = vpop.permute.xlu0 %826
        %828 = vrot.lane.b32.xlu0 %v201, 113
        %v829 = vpop.permute.xlu0 %828
        %vm830 = vcmp.lt.s32.totalorder %v208, 113
        %v831 = vsel %vm830, %v827, %v829
        %v832 = vsel %vm830, %v829, %v827
        %vm833 = vcmp.ge.s32.totalorder %v197, 4294967295
        %vm834 = vcmp.lt.s32.totalorder %v197, 15
        %vm835 = vmand %vm833, %vm834
        %vm836 = vmand %vm835, %vm215
        %vm837 = vmand %vm836, %vm217
        %v838 = vsel %vm837, 1, 0
        %v839 = vlaneseq
        %v840 = vshrl.u32 %v839, 7
        %v841 = vsub.s32 0, %v840
        %v842 = vrot.slane %v838, %v841
        %v843 = vlaneseq
        %v844 = vshrl.u32 %v843, 7
        %v845 = vsub.s32 1, %v844
        %v846 = vrot.slane %v838, %v845
        %vm847 = vcmp.eq.s32.totalorder %v842, 1
        %vm848 = vcmp.eq.s32.totalorder %v846, 1
        %v849 = vsel %vm847, %v831, 0.0
        %v850 = vsel %vm848, %v832, 0.0
        %s851 = scalar_lea.vmem %s1, 48
        %v852 = vld [vmem:[%s851] sm:$0xff]
        %v854 = vsel %vm259, %v852, 0
        %v857 = vsel %vm263, %v849, 0
        %v860 = vsel %vm263, %v850, 0
        %862 = vmatprep.subr.mxu0 0.0
        %863 = vmatpush1.msra.mxu0 0.0
        %864 = vmatprep.subr.mxu0 0.0
        %865 = vmatpush1.msra.mxu0 0.0
        %866 = vmatprep.subr.mxu0 0.0
        %867 = vmatpush1.msra.mxu0 0.0
        %868 = vmatprep.subr.mxu0 0.0
        %869 = vmatpush1.msra.mxu0 0.0
        %870 = vmatprep.subr.mxu0 0.0
        %871 = vmatpush1.msra.mxu0 0.0
        %872 = vmatprep.subr.mxu0 0.0
        %873 = vmatpush1.msra.mxu0 0.0
        %874 = vmatprep.subr.mxu0 0.0
        %875 = vmatpush1.msra.mxu0 0.0
        %876 = vmatprep.subr.mxu0 0.0
        %877 = vmatpush1.msra.mxu0 0.0
        %878 = vmatprep.subr.mxu0 0.0
        %879 = vmatpush1.msra.mxu0 0.0
        %880 = vmatprep.subr.mxu0 0.0
        %881 = vmatpush1.msra.mxu0 0.0
        %882 = vmatprep.subr.mxu0 0.0
        %883 = vmatpush1.msra.mxu0 0.0
        %884 = vmatprep.subr.mxu0 0.0
        %885 = vmatpush1.msra.mxu0 0.0
        %886 = vmatprep.subr.mxu0 0.0
        %887 = vmatpush1.msra.mxu0 0.0
        %888 = vmatprep.subr.mxu0 0.0
        %889 = vmatpush1.msra.mxu0 0.0
        %890 = vmatprep.subr.mxu0 0.0
        %891 = vmatpush1.msra.mxu0 0.0
        %892 = vmatprep.subr.mxu0 %v860
        %893 = vmatpush1.msra.mxu0 %v857
        %894 = vmatprep.subr.mxu0 0.0
        %895 = vmatpush2.msra.mxu0 0.0
        %896 = vmatprep.subr.mxu0 0.0
        %897 = vmatpush2.msra.mxu0 0.0
        %898 = vmatprep.subr.mxu0 0.0
        %899 = vmatpush2.msra.mxu0 0.0
        %900 = vmatprep.subr.mxu0 0.0
        %901 = vmatpush2.msra.mxu0 0.0
        %902 = vmatprep.subr.mxu0 0.0
        %903 = vmatpush2.msra.mxu0 0.0
        %904 = vmatprep.subr.mxu0 0.0
        %905 = vmatpush2.msra.mxu0 0.0
        %906 = vmatprep.subr.mxu0 0.0
        %907 = vmatpush2.msra.mxu0 0.0
        %908 = vmatprep.subr.mxu0 0.0
        %909 = vmatpush2.msra.mxu0 0.0
        %910 = vmatprep.subr.mxu0 0.0
        %911 = vmatpush2.msra.mxu0 0.0
        %912 = vmatprep.subr.mxu0 0.0
        %913 = vmatpush2.msra.mxu0 0.0
        %914 = vmatprep.subr.mxu0 0.0
        %915 = vmatpush2.msra.mxu0 0.0
        %916 = vmatprep.subr.mxu0 0.0
        %917 = vmatpush2.msra.mxu0 0.0
        %918 = vmatprep.subr.mxu0 0.0
        %919 = vmatpush2.msra.mxu0 0.0
        %920 = vmatprep.subr.mxu0 0.0
        %921 = vmatpush2.msra.mxu0 0.0
        %922 = vmatprep.subr.mxu0 0.0
        %923 = vmatpush2.msra.mxu0 0.0
        %924 = vmatprep.subr.mxu0 0.0
        %925 = vmatpush2.msra.mxu0 0.0
        %926 = vmatprep.mubr.f32.mxu0 0.0
        %927 = vmatmul.mubr.f32.gmra.mxu0 %v854
        %v928 = vpop.f32.mrf.mxu0
        %v929 = vadd.f32 0.0, %v928
        %v930 = vpop.f32.mrf.mxu0
        %v931 = vadd.f32 0.0, %v930
        %932 = vdwg.mxu0
        %v933 = vadd.f32 %v824, %v929
        %v934 = vadd.f32 %v825, %v931
        %935 = vrot.lane.b32.xlu0 %v196, 112
        %v936 = vpop.permute.xlu0 %935
        %937 = vrot.lane.b32.xlu0 %v201, 112
        %v938 = vpop.permute.xlu0 %937
        %vm939 = vcmp.lt.s32.totalorder %v208, 112
        %v940 = vsel %vm939, %v936, %v938
        %v941 = vsel %vm939, %v938, %v936
        %vm942 = vmand %vm835, %vm240
        %vm943 = vmand %vm942, %vm242
        %v944 = vsel %vm943, 1, 0
        %v945 = vlaneseq
        %v946 = vshrl.u32 %v945, 7
        %v947 = vsub.s32 0, %v946
        %v948 = vrot.slane %v944, %v947
        %v949 = vlaneseq
        %v950 = vshrl.u32 %v949, 7
        %v951 = vsub.s32 1, %v950
        %v952 = vrot.slane %v944, %v951
        %vm953 = vcmp.eq.s32.totalorder %v948, 1
        %vm954 = vcmp.eq.s32.totalorder %v952, 1
        %v955 = vsel %vm953, %v940, 0.0
        %v956 = vsel %vm954, %v941, 0.0
        %s957 = scalar_lea.vmem %s1, 56
        %v958 = vld [vmem:[%s957] sm:$0xff]
        %v960 = vsel %vm259, %v958, 0
        %v963 = vsel %vm263, %v955, 0
        %v966 = vsel %vm263, %v956, 0
        %968 = vmatprep.subr.mxu0 0.0
        %969 = vmatpush1.msra.mxu0 0.0
        %970 = vmatprep.subr.mxu0 0.0
        %971 = vmatpush1.msra.mxu0 0.0
        %972 = vmatprep.subr.mxu0 0.0
        %973 = vmatpush1.msra.mxu0 0.0
        %974 = vmatprep.subr.mxu0 0.0
        %975 = vmatpush1.msra.mxu0 0.0
        %976 = vmatprep.subr.mxu0 0.0
        %977 = vmatpush1.msra.mxu0 0.0
        %978 = vmatprep.subr.mxu0 0.0
        %979 = vmatpush1.msra.mxu0 0.0
        %980 = vmatprep.subr.mxu0 0.0
        %981 = vmatpush1.msra.mxu0 0.0
        %982 = vmatprep.subr.mxu0 0.0
        %983 = vmatpush1.msra.mxu0 0.0
        %984 = vmatprep.subr.mxu0 0.0
        %985 = vmatpush1.msra.mxu0 0.0
        %986 = vmatprep.subr.mxu0 0.0
        %987 = vmatpush1.msra.mxu0 0.0
        %988 = vmatprep.subr.mxu0 0.0
        %989 = vmatpush1.msra.mxu0 0.0
        %990 = vmatprep.subr.mxu0 0.0
        %991 = vmatpush1.msra.mxu0 0.0
        %992 = vmatprep.subr.mxu0 0.0
        %993 = vmatpush1.msra.mxu0 0.0
        %994 = vmatprep.subr.mxu0 0.0
        %995 = vmatpush1.msra.mxu0 0.0
        %996 = vmatprep.subr.mxu0 0.0
        %997 = vmatpush1.msra.mxu0 0.0
        %998 = vmatprep.subr.mxu0 %v966
        %999 = vmatpush1.msra.mxu0 %v963
        %1000 = vmatprep.subr.mxu0 0.0
        %1001 = vmatpush2.msra.mxu0 0.0
        %1002 = vmatprep.subr.mxu0 0.0
        %1003 = vmatpush2.msra.mxu0 0.0
        %1004 = vmatprep.subr.mxu0 0.0
        %1005 = vmatpush2.msra.mxu0 0.0
        %1006 = vmatprep.subr.mxu0 0.0
        %1007 = vmatpush2.msra.mxu0 0.0
        %1008 = vmatprep.subr.mxu0 0.0
        %1009 = vmatpush2.msra.mxu0 0.0
        %1010 = vmatprep.subr.mxu0 0.0
        %1011 = vmatpush2.msra.mxu0 0.0
        %1012 = vmatprep.subr.mxu0 0.0
        %1013 = vmatpush2.msra.mxu0 0.0
        %1014 = vmatprep.subr.mxu0 0.0
        %1015 = vmatpush2.msra.mxu0 0.0
        %1016 = vmatprep.subr.mxu0 0.0
        %1017 = vmatpush2.msra.mxu0 0.0
        %1018 = vmatprep.subr.mxu0 0.0
        %1019 = vmatpush2.msra.mxu0 0.0
        %1020 = vmatprep.subr.mxu0 0.0
        %1021 = vmatpush2.msra.mxu0 0.0
        %1022 = vmatprep.subr.mxu0 0.0
        %1023 = vmatpush2.msra.mxu0 0.0
        %1024 = vmatprep.subr.mxu0 0.0
        %1025 = vmatpush2.msra.mxu0 0.0
        %1026 = vmatprep.subr.mxu0 0.0
        %1027 = vmatpush2.msra.mxu0 0.0
        %1028 = vmatprep.subr.mxu0 0.0
        %1029 = vmatpush2.msra.mxu0 0.0
        %1030 = vmatprep.subr.mxu0 0.0
        %1031 = vmatpush2.msra.mxu0 0.0
        %1032 = vmatprep.mubr.f32.mxu0 0.0
        %1033 = vmatmul.mubr.f32.gmra.mxu0 %v960
        %v1034 = vpop.f32.mrf.mxu0
        %v1035 = vadd.f32 0.0, %v1034
        %v1036 = vpop.f32.mrf.mxu0
        %v1037 = vadd.f32 0.0, %v1036
        %1038 = vdwg.mxu0
        %v1039 = vadd.f32 %v933, %v1035
        %v1040 = vadd.f32 %v934, %v1037
        %1041 = vrot.lane.b32.xlu0 %v196, 111
        %v1042 = vpop.permute.xlu0 %1041
        %1043 = vrot.lane.b32.xlu0 %v201, 111
        %v1044 = vpop.permute.xlu0 %1043
        %vm1045 = vcmp.lt.s32.totalorder %v208, 111
        %v1046 = vsel %vm1045, %v1042, %v1044
        %v1047 = vsel %vm1045, %v1044, %v1042
        %vm1048 = vmand %vm835, %vm428
        %vm1049 = vmand %vm1048, %vm430
        %v1050 = vsel %vm1049, 1, 0
        %v1051 = vlaneseq
        %v1052 = vshrl.u32 %v1051, 7
        %v1053 = vsub.s32 0, %v1052
        %v1054 = vrot.slane %v1050, %v1053
        %v1055 = vlaneseq
        %v1056 = vshrl.u32 %v1055, 7
        %v1057 = vsub.s32 1, %v1056
        %v1058 = vrot.slane %v1050, %v1057
        %vm1059 = vcmp.eq.s32.totalorder %v1054, 1
        %vm1060 = vcmp.eq.s32.totalorder %v1058, 1
        %v1061 = vsel %vm1059, %v1046, 0.0
        %v1062 = vsel %vm1060, %v1047, 0.0
        %s1063 = scalar_lea.vmem %s1, 64
        %v1064 = vld [vmem:[%s1063] sm:$0xff]
        %v1066 = vsel %vm259, %v1064, 0
        %v1069 = vsel %vm263, %v1061, 0
        %v1072 = vsel %vm263, %v1062, 0
        %1074 = vmatprep.subr.mxu0 0.0
        %1075 = vmatpush1.msra.mxu0 0.0
        %1076 = vmatprep.subr.mxu0 0.0
        %1077 = vmatpush1.msra.mxu0 0.0
        %1078 = vmatprep.subr.mxu0 0.0
        %1079 = vmatpush1.msra.mxu0 0.0
        %1080 = vmatprep.subr.mxu0 0.0
        %1081 = vmatpush1.msra.mxu0 0.0
        %1082 = vmatprep.subr.mxu0 0.0
        %1083 = vmatpush1.msra.mxu0 0.0
        %1084 = vmatprep.subr.mxu0 0.0
        %1085 = vmatpush1.msra.mxu0 0.0
        %1086 = vmatprep.subr.mxu0 0.0
        %1087 = vmatpush1.msra.mxu0 0.0
        %1088 = vmatprep.subr.mxu0 0.0
        %1089 = vmatpush1.msra.mxu0 0.0
        %1090 = vmatprep.subr.mxu0 0.0
        %1091 = vmatpush1.msra.mxu0 0.0
        %1092 = vmatprep.subr.mxu0 0.0
        %1093 = vmatpush1.msra.mxu0 0.0
        %1094 = vmatprep.subr.mxu0 0.0
        %1095 = vmatpush1.msra.mxu0 0.0
        %1096 = vmatprep.subr.mxu0 0.0
        %1097 = vmatpush1.msra.mxu0 0.0
        %1098 = vmatprep.subr.mxu0 0.0
        %1099 = vmatpush1.msra.mxu0 0.0
        %1100 = vmatprep.subr.mxu0 0.0
        %1101 = vmatpush1.msra.mxu0 0.0
        %1102 = vmatprep.subr.mxu0 0.0
        %1103 = vmatpush1.msra.mxu0 0.0
        %1104 = vmatprep.subr.mxu0 %v1072
        %1105 = vmatpush1.msra.mxu0 %v1069
        %1106 = vmatprep.subr.mxu0 0.0
        %1107 = vmatpush2.msra.mxu0 0.0
        %1108 = vmatprep.subr.mxu0 0.0
        %1109 = vmatpush2.msra.mxu0 0.0
        %1110 = vmatprep.subr.mxu0 0.0
        %1111 = vmatpush2.msra.mxu0 0.0
        %1112 = vmatprep.subr.mxu0 0.0
        %1113 = vmatpush2.msra.mxu0 0.0
        %1114 = vmatprep.subr.mxu0 0.0
        %1115 = vmatpush2.msra.mxu0 0.0
        %1116 = vmatprep.subr.mxu0 0.0
        %1117 = vmatpush2.msra.mxu0 0.0
        %1118 = vmatprep.subr.mxu0 0.0
        %1119 = vmatpush2.msra.mxu0 0.0
        %1120 = vmatprep.subr.mxu0 0.0
        %1121 = vmatpush2.msra.mxu0 0.0
        %1122 = vmatprep.subr.mxu0 0.0
        %1123 = vmatpush2.msra.mxu0 0.0
        %1124 = vmatprep.subr.mxu0 0.0
        %1125 = vmatpush2.msra.mxu0 0.0
        %1126 = vmatprep.subr.mxu0 0.0
        %1127 = vmatpush2.msra.mxu0 0.0
        %1128 = vmatprep.subr.mxu0 0.0
        %1129 = vmatpush2.msra.mxu0 0.0
        %1130 = vmatprep.subr.mxu0 0.0
        %1131 = vmatpush2.msra.mxu0 0.0
        %1132 = vmatprep.subr.mxu0 0.0
        %1133 = vmatpush2.msra.mxu0 0.0
        %1134 = vmatprep.subr.mxu0 0.0
        %1135 = vmatpush2.msra.mxu0 0.0
        %1136 = vmatprep.subr.mxu0 0.0
        %1137 = vmatpush2.msra.mxu0 0.0
        %1138 = vmatprep.mubr.f32.mxu0 0.0
        %1139 = vmatmul.mubr.f32.gmra.mxu0 %v1066
        %v1140 = vpop.f32.mrf.mxu0
        %v1141 = vadd.f32 0.0, %v1140
        %v1142 = vpop.f32.mrf.mxu0
        %v1143 = vadd.f32 0.0, %v1142
        %1144 = vdwg.mxu0
        %v1145 = vadd.f32 %v1039, %v1141
        %v1146 = vadd.f32 %v1040, %v1143
        %v1147 = vadd.f32 %v1145, %v1146
        %1148 = vadd.xlane.f32.xlu0 %v1147
        %v1149 = vpop.xlane.xlu0 %1148
        %v1150 = vrcp.pop 256.0
        %v1151 = vmul.f32 %v1149, %v1150
        %v1152 = vsub.f32 %v1145, %v1151
        %v1153 = vsub.f32 %v1146, %v1151
        %v1154 = vmul.f32 %v1152, %v1152
        %v1155 = vmul.f32 %v1153, %v1153
        %v1156 = vadd.f32 %v1154, %v1155
        %1157 = vadd.xlane.f32.xlu0 %v1156
        %v1158 = vpop.xlane.xlu0 %1157
        %v1159 = vmul.f32 %v1158, %v1150
        %v1160 = vadd.f32 %v1159, 1e-05
        %v1161 = vrsqrt.pop %v1160
        %v1162 = vld [vmem:[%s3] sm:$0xff]
        %v1163 = vmul.f32 %v1162, %v1161
        %v1164 = vmul.f32 %v1151, %v1163
        %1166 = vrot.lane.b32.xlu0 %v1164, 1
        %v1167 = vpop.permute.xlu0 %1166
        %v1169 = vsub.f32 %v1162, %v1167
        %v1170 = vlaneseq
        %v1171 = vshrl.u32 %v1170, 7
        %vm1172 = vcmp.lt.s32.totalorder %v1171, 4
        %1174 = vrot.lane.b32.xlu0 %v1162, 126
        %v1175 = vpop.permute.xlu0 %1174
        %v1177 = vsel %vm1172, %v1163, %v1175
        %v1178 = vsel %vm1172, %v1169, %v1175
        %1180 = vset.pattern.permute.xlu0 0
        %1181 = vperm.xlu0 %1180, %v1177
        %v1182 = vpop.permute.xlu0 %1181
        %v1184 = vmul.f32 %v1145, %v1182
        %v1185 = vmul.f32 %v1146, %v1182
        %1187 = vset.pattern.permute.xlu0 1
        %1188 = vperm.xlu0 %1187, %v1178
        %v1189 = vpop.permute.xlu0 %1188
        %v1191 = vadd.f32 %v1184, %v1189
        %v1192 = vadd.f32 %v1185, %v1189
        %v1193 = vxor.u32 %v1191, 2147483648
        %v1194 = vxor.u32 %v1192, 2147483648
        %v1195 = vmul.f32 %v1193, 1.442695
        %v1196 = vpow.pop %v1195
        %v1197 = vmul.f32 %v1194, 1.442695
        %v1198 = vpow.pop %v1197
        %v1199 = vadd.f32 %v1196, 1.0
        %v1200 = vadd.f32 %v1198, 1.0
        %v1201 = vrcp.pop %v1199
        %v1202 = vmul.f32 1.0, %v1201
        %v1203 = vrcp.pop %v1200
        %v1204 = vmul.f32 1.0, %v1203
        %v1205 = vmul.f32 %v1191, %v1202
        %v1206 = vmul.f32 %v1192, %v1204
        %1207 = vst [vmem:[%s190] sm:$0xff] %v1205
        %1208 = vst [vmem:[%s190 + $0x8] sm:$0xff] %v1206
        %s1209 = sand.u32 %s115, 1
        %s1210 = scalar_lea.sflag [#allocation3], %s1209
        %s1211 = sand.u32 %s115, 1
        %s1212 = smul.addr %s1211, 16
        %s1213 = scalar_lea.vmem [#allocation2], %s1212
        // Predicated region
        $region37: #{tpu_custom_call.1} parent=35 // pred_check
          %p1214 = pneg %p125
        $region38: #{tpu_custom_call.1} parent=35 // pred_check_branch
          %1216 = sbr.rel (%p1214) target = $region40
        $region39: #{tpu_custom_call.1} parent=35 // pred_region
          %s1218 = ssub.s32 256, 256
          %1219 = vsyncadd %s1210, %s1218
          %s1220 = smul.addr %s18, 2
          %s1221 = smul.addr %s1220, 128
          %s1222 = scalar_lea.hbm %s4, %s1221
          %s1224 = sshll.u32 %s1213, 4
          %s1225 = int_to_ptr.vmem [resolvable:$true] %s1224
          %1227 = dma.vmem_to_hbm [thread:$0]  %s1225, 256, %s1222, %s1210
        $region40: #{tpu_custom_call.1} parent=35 // pred_fallthru
          _
      $region36: #{tpu_custom_call.1} parent=5 // pred_fallthru
        _
      %p1228 = scmp.le.s32.totalorder 2, %s13
      // Predicated region
      $region41: #{tpu_custom_call.1} parent=5 // pred_check
        %p1229 = pneg %p1228
      $region42: #{tpu_custom_call.1} parent=5 // pred_check_branch
        %1231 = sbr.rel (%p1229) target = $region44
      $region43: #{tpu_custom_call.1} parent=5 // pred_region
        %s1232 = ssub.s32 %s13, 2
        // Predicated region
        $region45: #{tpu_custom_call.1} parent=43 // pred_check
          %p1233 = pneg %p131
        $region46: #{tpu_custom_call.1} parent=43 // pred_check_branch
          %1235 = sbr.rel (%p1233) target = $region48
        $region47: #{tpu_custom_call.1} parent=43 // pred_region
          %s1236 = sand.u32 %s116, 1
          %s1237 = scalar_lea.sflag [#allocation3], %s1236
          %s1238 = sand.u32 %s116, 1
          %s1239 = smul.addr %s1238, 16
          %s1240 = scalar_lea.vmem [#allocation2], %s1239
          %1241 = dma.done %s1237, 256
        $region48: #{tpu_custom_call.1} parent=43 // pred_fallthru
          _
      $region44: #{tpu_custom_call.1} parent=5 // pred_fallthru
        _
    $region6: #{tpu_custom_call.1} parent=1 // loop_footer
      %s17 = sadd.s32 1, %s13
    $region7: #{tpu_custom_call.1} parent=1 // loop_footer_branch
      %12 = sbr.rel target = $region3
    $region8: #{tpu_custom_call.1} parent=1 // loop_exit
      _
    %1242 = vsyncpa [#allocation3], 1
    %s1243 = scalar_lea.sflag [#allocation3], 1
    %1244 = vsyncpa %s1243, 1

</llo_original>
